<compile_context>
chip_gen: v6e
topology: v6e:2x2x1
jax: 0.10.0
libtpu: 0.0.40
codegen_flags: <defaults>
</compile_context>

<pallas_src>
import jax
import jax.numpy as jnp
from jax.experimental import pallas as pl
from jax.experimental.pallas import tpu as pltpu


_SQRT_2_OVER_PI = 0.7978845608028654
_GELU_COEFF = 0.044715


def _mlp_kernel(x_ref, w1_ref, b1_ref, w2_ref, b2_ref, o_ref):
    """One (block_m, C_in) row tile of fc1 -> GELU -> fc2, all in vregs."""
    # bf16 MXU operands, f32 accumulation: native MXU rate, half the VMEM bytes.
    x = x_ref[...].astype(jnp.bfloat16)                                  # (tm, C_in)
    h = jnp.dot(x, w1_ref[...], preferred_element_type=jnp.float32)     # (tm, H) f32
    h = h + b1_ref[...]

    # GELU, tanh approximation, kept in f32 (pure VPU/EUP work, hidden under
    # MXU/DMA; tanh lands on the EUP slot).
    # TODO(synk): PyTorch nn.GELU() defaults to the exact erf formulation; the
    # tanh approximation differs by <~3e-4 absolute (validated vs erf ref below).
    h = 0.5 * h * (1.0 + jnp.tanh(_SQRT_2_OVER_PI * (h + _GELU_COEFF * h * h * h)))

    o = jnp.dot(h.astype(jnp.bfloat16), w2_ref[...],
                preferred_element_type=jnp.float32)                      # (tm, C_out)
    o = o + b2_ref[...]

    # nn.Dropout(p=0.0) is the identity -> nothing to do.
    o_ref[...] = o.astype(o_ref.dtype)


def prepare_params(torch_layout_params):
    """One-time conversion from PyTorch nn.Linear layout to kernel layout.

    fc1.weight (hidden, C_in)  -> W1^T (C_in, hidden), bf16
    fc2.weight (C_out, hidden) -> W2^T (hidden, C_out), bf16
    Biases stay f32 (added after the f32 accumulation).
    Doing the transpose/cast here (once) keeps per-call XLA transposes off the
    kernel's critical path.
    """
    w1_t = jnp.asarray(torch_layout_params["w1"]).T.astype(jnp.bfloat16)
    w2_t = jnp.asarray(torch_layout_params["w2"]).T.astype(jnp.bfloat16)
    b1 = jnp.asarray(torch_layout_params["b1"], jnp.float32).reshape(1, -1)
    b2 = jnp.asarray(torch_layout_params["b2"], jnp.float32).reshape(1, -1)
    return {"w1_t": w1_t, "b1": b1, "w2_t": w2_t, "b2": b2}


def _round_up(x, n):
    return ((x + n - 1) // n) * n


def _choose_block_m(m, c_in, hidden, c_out, io_bytes,
                    max_block_m=2048, vmem_budget_bytes=12 * 1024 * 1024):
    """Pick the row tile: as big as the VMEM budget allows, capped at 2048.

    Budget counts double-buffered x/out tiles, the f32 hidden intermediate
    (spills from the 64-vreg file for any sizeable tile), and the resident
    bf16 weight blocks.  12 MiB stays under v5e's 16 MiB scoped default and is
    trivial for v6e/v7x.
    """
    per_row = 2 * c_in * io_bytes + 2 * c_out * io_bytes + hidden * 4
    weight_bytes = 2 * 2 * (c_in * hidden + hidden * c_out)  # bf16, double-buffered
    fit_rows = max(128, (vmem_budget_bytes - weight_bytes) // per_row)
    bm = min(max_block_m, int(fit_rows), _round_up(m, 8))
    bm = max(8, (bm // 8) * 8)  # sublane multiple for the (8,128) tiling rule
    # Prefer >= 2 grid steps for large problems so the single "parallel" axis
    # shards across both TensorCores on v7x; for small M a single big tile is
    # best on v5e/v6e (one ~0.35us step), so only split when tiles stay large.
    if bm >= m and m > 1024:
        bm = _round_up(pl.cdiv(m, 2), 128)
    return bm


def mlp_forward(x, params, *, max_block_m=2048):
    """Pallas forward for Mlp.  x: (..., C_in); params from prepare_params()."""
    orig_shape = x.shape
    c_in = orig_shape[-1]

    w1_t, w2_t = params["w1_t"], params["w2_t"]
    b1, b2 = params["b1"], params["b2"]
    hidden = w1_t.shape[1]
    c_out = w2_t.shape[1]

    # Fold all leading dims (batch, sequence) into rows.  No padding: Pallas
    # masks the ragged last block's loads/stores, and out_shape is exactly M.
    x2d = x.reshape(-1, c_in)
    m = x2d.shape[0]
    block_m = _choose_block_m(m, c_in, hidden, c_out, x2d.dtype.itemsize,
                              max_block_m=max_block_m)
    grid = (pl.cdiv(m, block_m),)

    cost = pl.CostEstimate(
        flops=2 * m * (c_in * hidden + hidden * c_out),
        transcendentals=m * hidden,
        bytes_accessed=(x2d.size * x2d.dtype.itemsize
                        + m * c_out * x2d.dtype.itemsize
                        + w1_t.size * 2 + w2_t.size * 2
                        + b1.size * 4 + b2.size * 4),
    )

    out = pl.pallas_call(
        _mlp_kernel,
        out_shape=jax.ShapeDtypeStruct((m, c_out), x.dtype),
        grid=grid,
        in_specs=[
            pl.BlockSpec((block_m, c_in), lambda i: (i, 0)),   # x row tile
            pl.BlockSpec((c_in, hidden),  lambda i: (0, 0)),   # W1^T (resident)
            pl.BlockSpec((1, hidden),     lambda i: (0, 0)),   # b1
            pl.BlockSpec((hidden, c_out), lambda i: (0, 0)),   # W2^T (resident)
            pl.BlockSpec((1, c_out),      lambda i: (0, 0)),   # b2
        ],
        out_specs=pl.BlockSpec((block_m, c_out), lambda i: (i, 0)),
        compiler_params=pltpu.CompilerParams(
            dimension_semantics=("parallel",)),
        cost_estimate=cost,
    )(x2d, w1_t, b1, w2_t, b2)

    return out.reshape(*orig_shape[:-1], c_out)


def reference_jax(x, torch_layout_params):
    """Pure-JAX transcription of the PyTorch forward (exact erf GELU, f32)."""
    h = x @ torch_layout_params["w1"].T + torch_layout_params["b1"]
    h = jax.nn.gelu(h, approximate=False)       # == PyTorch nn.GELU() default
    return h @ torch_layout_params["w2"].T + torch_layout_params["b2"]


if __name__ == "__main__":
    B, N = 2, 256                 # batch, sequence length
    C_IN, HIDDEN, C_OUT = 128, 256, 128

    key = jax.random.PRNGKey(0)
    k = jax.random.split(key, 5)
    torch_params = {
        "w1": 0.05 * jax.random.normal(k[0], (HIDDEN, C_IN), jnp.float32),
        "b1": 0.02 * jax.random.normal(k[1], (HIDDEN,), jnp.float32),
        "w2": 0.05 * jax.random.normal(k[2], (C_OUT, HIDDEN), jnp.float32),
        "b2": 0.02 * jax.random.normal(k[3], (C_OUT,), jnp.float32),
    }
    x = jax.random.normal(k[4], (B, N, C_IN), jnp.float32)

    params = prepare_params(torch_params)
    out = jax.block_until_ready(mlp_forward(x, params))
    ref = jax.block_until_ready(reference_jax(x, torch_params))

    assert out.shape == (B, N, C_OUT), out.shape
    err = float(jnp.max(jnp.abs(out - ref)))
    # Tolerance covers bf16 MXU operands + tanh-approx GELU vs exact erf.
    assert err < 2e-2, f"max abs error too large: {err}"
    print("KERNEL_OK")
</pallas_src>

<mosaic_0001>
module attributes {stable_mosaic.version = 11 : i64} {
  func.func @_mlp_kernel(%arg0: i32, %arg1: memref<512x128xf32, #tpu.memory_space<vmem>>, %arg2: memref<128x256xbf16, #tpu.memory_space<vmem>>, %arg3: memref<1x256xf32, #tpu.memory_space<vmem>>, %arg4: memref<256x128xbf16, #tpu.memory_space<vmem>>, %arg5: memref<1x128xf32, #tpu.memory_space<vmem>>, %arg6: memref<512x128xf32, #tpu.memory_space<vmem>>) attributes {dimension_semantics = [#tpu.dimension_semantics<parallel>], iteration_bounds = array<i64: 1>, scalar_prefetch = 0 : i64, scratch_operands = 0 : i64, tpu.core_type = #tpu.core_type<tc>, window_params = [{transform_indices = @transform_0, window_bounds = array<i64: 512, 128>}, {pipeline_mode = #tpu.pipeline_mode<synchronous>, transform_indices = @transform_1, window_bounds = array<i64: 128, 256>}, {pipeline_mode = #tpu.pipeline_mode<synchronous>, transform_indices = @transform_2, window_bounds = array<i64: 1, 256>}, {pipeline_mode = #tpu.pipeline_mode<synchronous>, transform_indices = @transform_3, window_bounds = array<i64: 256, 128>}, {pipeline_mode = #tpu.pipeline_mode<synchronous>, transform_indices = @transform_4, window_bounds = array<i64: 1, 128>}, {transform_indices = @transform_5, window_bounds = array<i64: 512, 128>}]} {
    %c0 = arith.constant 0 : index
    %c0_0 = arith.constant 0 : index
    %0 = vector.load %arg1[%c0, %c0_0] : memref<512x128xf32, #tpu.memory_space<vmem>>, vector<512x128xf32>
    %1 = arith.truncf %0 : vector<512x128xf32> to vector<512x128xbf16>
    %c0_1 = arith.constant 0 : index
    %c0_2 = arith.constant 0 : index
    %2 = vector.load %arg2[%c0_1, %c0_2] : memref<128x256xbf16, #tpu.memory_space<vmem>>, vector<128x256xbf16>
    %cst = arith.constant dense<0.000000e+00> : vector<512x256xf32>
    %3 = tpu.matmul %1, %2, %cst {dimension_numbers = #tpu.dot_dimension_numbers<[1], [0], [0], [1], [0, 0, 1, 1], [], []>} : vector<512x128xbf16>, vector<128x256xbf16>, vector<512x256xf32> -> vector<512x256xf32>
    %c0_3 = arith.constant 0 : index
    %c0_4 = arith.constant 0 : index
    %4 = vector.load %arg3[%c0_3, %c0_4] : memref<1x256xf32, #tpu.memory_space<vmem>>, vector<1x256xf32>
    %5 = vector.broadcast %4 : vector<1x256xf32> to vector<512x256xf32>
    %6 = arith.addf %3, %5 : vector<512x256xf32>
    %cst_5 = arith.constant 5.000000e-01 : f32
    %7 = vector.broadcast %cst_5 : f32 to vector<512x256xf32>
    %8 = arith.mulf %7, %6 : vector<512x256xf32>
    %cst_6 = arith.constant 4.471500e-02 : f32
    %9 = vector.broadcast %cst_6 : f32 to vector<512x256xf32>
    %10 = arith.mulf %9, %6 : vector<512x256xf32>
    %11 = arith.mulf %10, %6 : vector<512x256xf32>
    %12 = arith.mulf %11, %6 : vector<512x256xf32>
    %13 = arith.addf %6, %12 : vector<512x256xf32>
    %cst_7 = arith.constant 0.797884583 : f32
    %14 = vector.broadcast %cst_7 : f32 to vector<512x256xf32>
    %15 = arith.mulf %14, %13 : vector<512x256xf32>
    %16 = math.tanh %15 : vector<512x256xf32>
    %cst_8 = arith.constant 1.000000e+00 : f32
    %17 = vector.broadcast %cst_8 : f32 to vector<512x256xf32>
    %18 = arith.addf %17, %16 : vector<512x256xf32>
    %19 = arith.mulf %8, %18 : vector<512x256xf32>
    %20 = arith.truncf %19 : vector<512x256xf32> to vector<512x256xbf16>
    %c0_9 = arith.constant 0 : index
    %c0_10 = arith.constant 0 : index
    %21 = vector.load %arg4[%c0_9, %c0_10] : memref<256x128xbf16, #tpu.memory_space<vmem>>, vector<256x128xbf16>
    %cst_11 = arith.constant dense<0.000000e+00> : vector<512x128xf32>
    %22 = tpu.matmul %20, %21, %cst_11 {dimension_numbers = #tpu.dot_dimension_numbers<[1], [0], [0], [1], [0, 0, 1, 1], [], []>} : vector<512x256xbf16>, vector<256x128xbf16>, vector<512x128xf32> -> vector<512x128xf32>
    %c0_12 = arith.constant 0 : index
    %c0_13 = arith.constant 0 : index
    %23 = vector.load %arg5[%c0_12, %c0_13] : memref<1x128xf32, #tpu.memory_space<vmem>>, vector<1x128xf32>
    %24 = vector.broadcast %23 : vector<1x128xf32> to vector<512x128xf32>
    %25 = arith.addf %22, %24 : vector<512x128xf32>
    %c0_14 = arith.constant 0 : index
    %c0_15 = arith.constant 0 : index
    %26 = vector.load %arg6[%c0_14, %c0_15] : memref<512x128xf32, #tpu.memory_space<vmem>>, vector<512x128xf32>
    tpu.vector_store %arg6[%c0_14, %c0_15], %25 {strides = array<i32>} : memref<512x128xf32, #tpu.memory_space<vmem>>, vector<512x128xf32>,
    return
  }
  func.func @transform_0(%arg0: i32) -> (i32, i32) {
    %c0_i32 = arith.constant 0 : i32
    %c0_i32_0 = arith.constant 0 : i32
    return %arg0, %c0_i32 : i32, i32
  }
  func.func @transform_1(%arg0: i32) -> (i32, i32) {
    %c0_i32 = arith.constant 0 : i32
    %c0_i32_0 = arith.constant 0 : i32
    %c0_i32_1 = arith.constant 0 : i32
    return %c0_i32, %c0_i32_0 : i32, i32
  }
  func.func @transform_2(%arg0: i32) -> (i32, i32) {
    %c0_i32 = arith.constant 0 : i32
    %c0_i32_0 = arith.constant 0 : i32
    %c0_i32_1 = arith.constant 0 : i32
    return %c0_i32, %c0_i32_0 : i32, i32
  }
  func.func @transform_3(%arg0: i32) -> (i32, i32) {
    %c0_i32 = arith.constant 0 : i32
    %c0_i32_0 = arith.constant 0 : i32
    %c0_i32_1 = arith.constant 0 : i32
    return %c0_i32, %c0_i32_0 : i32, i32
  }
  func.func @transform_4(%arg0: i32) -> (i32, i32) {
    %c0_i32 = arith.constant 0 : i32
    %c0_i32_0 = arith.constant 0 : i32
    %c0_i32_1 = arith.constant 0 : i32
    return %c0_i32, %c0_i32_0 : i32, i32
  }
  func.func @transform_5(%arg0: i32) -> (i32, i32) {
    %c0_i32 = arith.constant 0 : i32
    %c0_i32_0 = arith.constant 0 : i32
    return %arg0, %c0_i32 : i32, i32
  }
}

</mosaic_0001>

<llo_original>
// kernel: tpu_custom_call.1
$region0: #{tpu_custom_call.1}
  #allocation0 [shape = 'u32[]', space=smem, size = 0x4, offset = 0x4, fixed_abs, tag = 'smem constant byte address 0x4 - core index']
  #allocation1 [shape = 'u32[144,128]{1,0:T(1,128)}', space=vmem, size = 0x12000, scoped, tag = 'internal scratch']
  %s0 = inlined_call_operand.hbm [shape: f32[512,128], index: 0, kind: input, shape index: {}]
  %s1 = inlined_call_operand.hbm [shape: bf16[128,256], index: 1, kind: input, shape index: {}]
  %s2 = inlined_call_operand.vmem [shape: f32[1,256], index: 2, kind: input, shape index: {}]
  %s3 = inlined_call_operand.hbm [shape: bf16[256,128], index: 3, kind: input, shape index: {}]
  %s4 = inlined_call_operand.vmem [shape: f32[1,128], index: 4, kind: input, shape index: {}]
  %s5 = inlined_call_operand.hbm [shape: f32[512,128], index: 5, kind: output, shape index: {}]
  %s6 = sld [smem:[#allocation0]]
  $region42: #{tpu_custom_call.1} parent=0
    _
  %s8 = ssub.s32 1, %s6
  %s9 = scalar_select 0, %s8, %s6
  $region1: #{tpu_custom_call.1} parent=0
    #allocation2 [shape = 'u8[262144]{0}', space=vmem, size = 0x40000, scoped, tag = 'input window, operand 0, single buffered']
    #allocation3 [shape = 's32[1]{0}', space=sflag, size = 0x4, scoped, tag = 'scoped memory for tpu_custom_call.1']
    #allocation4 [shape = 's32[1]{0}', space=sflag, size = 0x4, scoped, tag = 'scoped memory for tpu_custom_call.1']
    #allocation5 [shape = 'u8[65536]{0}', space=vmem, size = 0x10000, scoped, tag = 'input window, operand 1, single buffered']
    #allocation6 [shape = 's32[1]{0}', space=sflag, size = 0x4, scoped, tag = 'scoped memory for tpu_custom_call.1']
    #allocation7 [shape = 'u8[65536]{0}', space=vmem, size = 0x10000, scoped, tag = 'input window, operand 3, single buffered']
    #allocation8 [shape = 'u8[262144]{0}', space=vmem, size = 0x40000, scoped, tag = 'output window, operand 0, single buffered']
    %10 = vsyncpa [#allocation3], 0
    %11 = vsyncpa [#allocation6], 0
    %12 = vsyncpa [#allocation4], 0
    // Predicated region
    $region2: #{tpu_custom_call.1} parent=1 // pred_check
      _
    $region3: #{tpu_custom_call.1} parent=1 // pred_check_branch
      %14 = sbr.rel (0) target = $region5
    $region4: #{tpu_custom_call.1} parent=1 // pred_region
      %s16 = ssub.s32 8192, 8192
      %17 = vsyncadd [#allocation3], %s16
      %s18 = sshll.u32 [#allocation2], 4
      %s19 = int_to_ptr.vmem [resolvable:$true] %s18
      %24 = dma.hbm_to_vmem [thread:$0]  %s0, 8192, %s19, [#allocation3], 128, 128, 8
    $region5: #{tpu_custom_call.1} parent=1 // pred_fallthru
      _
    // Predicated region
    $region6: #{tpu_custom_call.1} parent=1 // pred_check
      _
    $region7: #{tpu_custom_call.1} parent=1 // pred_check_branch
      %26 = sbr.rel (0) target = $region9
    $region8: #{tpu_custom_call.1} parent=1 // pred_region
      %s28 = ssub.s32 2048, 2048
      %29 = vsyncadd [#allocation6], %s28
      %s30 = sshll.u32 [#allocation5], 4
      %s31 = int_to_ptr.vmem [resolvable:$true] %s30
      %36 = dma.hbm_to_vmem [thread:$0]  %s1, 2048, %s31, [#allocation6], 128, 128, 8
    $region9: #{tpu_custom_call.1} parent=1 // pred_fallthru
      _
    // Predicated region
    $region10: #{tpu_custom_call.1} parent=1 // pred_check
      _
    $region11: #{tpu_custom_call.1} parent=1 // pred_check_branch
      %38 = sbr.rel (0) target = $region13
    $region12: #{tpu_custom_call.1} parent=1 // pred_region
      _
    $region13: #{tpu_custom_call.1} parent=1 // pred_fallthru
      _
    // Predicated region
    $region14: #{tpu_custom_call.1} parent=1 // pred_check
      _
    $region15: #{tpu_custom_call.1} parent=1 // pred_check_branch
      %40 = sbr.rel (0) target = $region17
    $region16: #{tpu_custom_call.1} parent=1 // pred_region
      %s42 = ssub.s32 2048, 2048
      %43 = vsyncadd [#allocation6], %s42
      %s44 = sshll.u32 [#allocation7], 4
      %s45 = int_to_ptr.vmem [resolvable:$true] %s44
      %50 = dma.hbm_to_vmem [thread:$0]  %s3, 2048, %s45, [#allocation6], 64, 64, 4
    $region17: #{tpu_custom_call.1} parent=1 // pred_fallthru
      _
    // Predicated region
    $region18: #{tpu_custom_call.1} parent=1 // pred_check
      _
    $region19: #{tpu_custom_call.1} parent=1 // pred_check_branch
      %52 = sbr.rel (0) target = $region21
    $region20: #{tpu_custom_call.1} parent=1 // pred_region
      _
    $region21: #{tpu_custom_call.1} parent=1 // pred_fallthru
      _
    // Predicated region
    $region22: #{tpu_custom_call.1} parent=1 // pred_check
      _
    $region23: #{tpu_custom_call.1} parent=1 // pred_check_branch
      %54 = sbr.rel (0) target = $region25
    $region24: #{tpu_custom_call.1} parent=1 // pred_region
      %55 = dma.done [#allocation3], 8192
    $region25: #{tpu_custom_call.1} parent=1 // pred_fallthru
      _
    // Predicated region
    $region26: #{tpu_custom_call.1} parent=1 // pred_check
      _
    $region27: #{tpu_custom_call.1} parent=1 // pred_check_branch
      %57 = sbr.rel (0) target = $region29
    $region28: #{tpu_custom_call.1} parent=1 // pred_region
      %58 = dma.done [#allocation6], 2048
    $region29: #{tpu_custom_call.1} parent=1 // pred_fallthru
      _
    // Predicated region
    $region30: #{tpu_custom_call.1} parent=1 // pred_check
      _
    $region31: #{tpu_custom_call.1} parent=1 // pred_check_branch
      %60 = sbr.rel (0) target = $region33
    $region32: #{tpu_custom_call.1} parent=1 // pred_region
      %61 = dma.done [#allocation6], 2048
    $region33: #{tpu_custom_call.1} parent=1 // pred_fallthru
      _
    %v63 = vld [vmem:[#allocation2] sm:$0xff]
    %v64 = vld [vmem:[#allocation2 + $0x8] sm:$0xff]
    %v65 = vld [vmem:[#allocation2 + $0x10] sm:$0xff]
    %v66 = vld [vmem:[#allocation2 + $0x18] sm:$0xff]
    %v67 = vld [vmem:[#allocation2 + $0x20] sm:$0xff]
    %v68 = vld [vmem:[#allocation2 + $0x28] sm:$0xff]
    %v69 = vld [vmem:[#allocation2 + $0x30] sm:$0xff]
    %v70 = vld [vmem:[#allocation2 + $0x38] sm:$0xff]
    %v71 = vld [vmem:[#allocation2 + $0x40] sm:$0xff]
    %v72 = vld [vmem:[#allocation2 + $0x48] sm:$0xff]
    %v73 = vld [vmem:[#allocation2 + $0x50] sm:$0xff]
    %v74 = vld [vmem:[#allocation2 + $0x58] sm:$0xff]
    %v75 = vld [vmem:[#allocation2 + $0x60] sm:$0xff]
    %v76 = vld [vmem:[#allocation2 + $0x68] sm:$0xff]
    %v77 = vld [vmem:[#allocation2 + $0x70] sm:$0xff]
    %v78 = vld [vmem:[#allocation2 + $0x78] sm:$0xff]
    %v79 = vld [vmem:[#allocation2 + $0x80] sm:$0xff]
    %v80 = vld [vmem:[#allocation2 + $0x88] sm:$0xff]
    %v81 = vld [vmem:[#allocation2 + $0x90] sm:$0xff]
    %v82 = vld [vmem:[#allocation2 + $0x98] sm:$0xff]
    %v83 = vld [vmem:[#allocation2 + $0xa0] sm:$0xff]
    %v84 = vld [vmem:[#allocation2 + $0xa8] sm:$0xff]
    %v85 = vld [vmem:[#allocation2 + $0xb0] sm:$0xff]
    %v86 = vld [vmem:[#allocation2 + $0xb8] sm:$0xff]
    %v87 = vld [vmem:[#allocation2 + $0xc0] sm:$0xff]
    %v88 = vld [vmem:[#allocation2 + $0xc8] sm:$0xff]
    %v89 = vld [vmem:[#allocation2 + $0xd0] sm:$0xff]
    %v90 = vld [vmem:[#allocation2 + $0xd8] sm:$0xff]
    %v91 = vld [vmem:[#allocation2 + $0xe0] sm:$0xff]
    %v92 = vld [vmem:[#allocation2 + $0xe8] sm:$0xff]
    %v93 = vld [vmem:[#allocation2 + $0xf0] sm:$0xff]
    %v94 = vld [vmem:[#allocation2 + $0xf8] sm:$0xff]
    %v95 = vld [vmem:[#allocation2 + $0x100] sm:$0xff]
    %v96 = vld [vmem:[#allocation2 + $0x108] sm:$0xff]
    %v97 = vld [vmem:[#allocation2 + $0x110] sm:$0xff]
    %v98 = vld [vmem:[#allocation2 + $0x118] sm:$0xff]
    %v99 = vld [vmem:[#allocation2 + $0x120] sm:$0xff]
    %v100 = vld [vmem:[#allocation2 + $0x128] sm:$0xff]
    %v101 = vld [vmem:[#allocation2 + $0x130] sm:$0xff]
    %v102 = vld [vmem:[#allocation2 + $0x138] sm:$0xff]
    %v103 = vld [vmem:[#allocation2 + $0x140] sm:$0xff]
    %v104 = vld [vmem:[#allocation2 + $0x148] sm:$0xff]
    %v105 = vld [vmem:[#allocation2 + $0x150] sm:$0xff]
    %v106 = vld [vmem:[#allocation2 + $0x158] sm:$0xff]
    %v107 = vld [vmem:[#allocation2 + $0x160] sm:$0xff]
    %v108 = vld [vmem:[#allocation2 + $0x168] sm:$0xff]
    %v109 = vld [vmem:[#allocation2 + $0x170] sm:$0xff]
    %v110 = vld [vmem:[#allocation2 + $0x178] sm:$0xff]
    %v111 = vld [vmem:[#allocation2 + $0x180] sm:$0xff]
    %v112 = vld [vmem:[#allocation2 + $0x188] sm:$0xff]
    %v113 = vld [vmem:[#allocation2 + $0x190] sm:$0xff]
    %v114 = vld [vmem:[#allocation2 + $0x198] sm:$0xff]
    %v115 = vld [vmem:[#allocation2 + $0x1a0] sm:$0xff]
    %v116 = vld [vmem:[#allocation2 + $0x1a8] sm:$0xff]
    %v117 = vld [vmem:[#allocation2 + $0x1b0] sm:$0xff]
    %v118 = vld [vmem:[#allocation2 + $0x1b8] sm:$0xff]
    %v119 = vld [vmem:[#allocation2 + $0x1c0] sm:$0xff]
    %v120 = vld [vmem:[#allocation2 + $0x1c8] sm:$0xff]
    %v121 = vld [vmem:[#allocation2 + $0x1d0] sm:$0xff]
    %v122 = vld [vmem:[#allocation2 + $0x1d8] sm:$0xff]
    %v123 = vld [vmem:[#allocation2 + $0x1e0] sm:$0xff]
    %v124 = vld [vmem:[#allocation2 + $0x1e8] sm:$0xff]
    %v125 = vld [vmem:[#allocation2 + $0x1f0] sm:$0xff]
    %v126 = vld [vmem:[#allocation2 + $0x1f8] sm:$0xff]
    %v127 = vpack.c.bf16 %v64, %v63
    %v128 = vpack.c.bf16 %v66, %v65
    %v129 = vpack.c.bf16 %v68, %v67
    %v130 = vpack.c.bf16 %v70, %v69
    %v131 = vpack.c.bf16 %v72, %v71
    %v132 = vpack.c.bf16 %v74, %v73
    %v133 = vpack.c.bf16 %v76, %v75
    %v134 = vpack.c.bf16 %v78, %v77
    %v135 = vpack.c.bf16 %v80, %v79
    %v136 = vpack.c.bf16 %v82, %v81
    %v137 = vpack.c.bf16 %v84, %v83
    %v138 = vpack.c.bf16 %v86, %v85
    %v139 = vpack.c.bf16 %v88, %v87
    %v140 = vpack.c.bf16 %v90, %v89
    %v141 = vpack.c.bf16 %v92, %v91
    %v142 = vpack.c.bf16 %v94, %v93
    %v143 = vpack.c.bf16 %v96, %v95
    %v144 = vpack.c.bf16 %v98, %v97
    %v145 = vpack.c.bf16 %v100, %v99
    %v146 = vpack.c.bf16 %v102, %v101
    %v147 = vpack.c.bf16 %v104, %v103
    %v148 = vpack.c.bf16 %v106, %v105
    %v149 = vpack.c.bf16 %v108, %v107
    %v150 = vpack.c.bf16 %v110, %v109
    %v151 = vpack.c.bf16 %v112, %v111
    %v152 = vpack.c.bf16 %v114, %v113
    %v153 = vpack.c.bf16 %v116, %v115
    %v154 = vpack.c.bf16 %v118, %v117
    %v155 = vpack.c.bf16 %v120, %v119
    %v156 = vpack.c.bf16 %v122, %v121
    %v157 = vpack.c.bf16 %v124, %v123
    %v158 = vpack.c.bf16 %v126, %v125
    %v159 = vld [vmem:[#allocation5] sm:$0xff]
    %v160 = vld [vmem:[#allocation5 + $0x8] sm:$0xff]
    %v161 = vld [vmem:[#allocation5 + $0x10] sm:$0xff]
    %v162 = vld [vmem:[#allocation5 + $0x18] sm:$0xff]
    %v163 = vld [vmem:[#allocation5 + $0x20] sm:$0xff]
    %v164 = vld [vmem:[#allocation5 + $0x28] sm:$0xff]
    %v165 = vld [vmem:[#allocation5 + $0x30] sm:$0xff]
    %v166 = vld [vmem:[#allocation5 + $0x38] sm:$0xff]
    %v167 = vld [vmem:[#allocation5 + $0x40] sm:$0xff]
    %v168 = vld [vmem:[#allocation5 + $0x48] sm:$0xff]
    %v169 = vld [vmem:[#allocation5 + $0x50] sm:$0xff]
    %v170 = vld [vmem:[#allocation5 + $0x58] sm:$0xff]
    %v171 = vld [vmem:[#allocation5 + $0x60] sm:$0xff]
    %v172 = vld [vmem:[#allocation5 + $0x68] sm:$0xff]
    %v173 = vld [vmem:[#allocation5 + $0x70] sm:$0xff]
    %v174 = vld [vmem:[#allocation5 + $0x78] sm:$0xff]
    %v175 = vld [vmem:[%s2] sm:$0x3]
    %v177 = vlaneseq
    %v178 = vshrl.u32 %v177, 7
    %v179 = vsub.s32 0, %v178
    %v180 = vrot.slane %v175, %v179
    %v181 = vlaneseq
    %v182 = vshrl.u32 %v181, 7
    %v183 = vsub.s32 1, %v182
    %v184 = vrot.slane %v175, %v183
    %v203 = vunpack.c.l.b16 %v159
    %v204 = vunpack.c.h.b16 %v159
    %v205 = vunpack.c.l.b16 %v160
    %v206 = vunpack.c.h.b16 %v160
    %v207 = vunpack.c.l.b16 %v161
    %v208 = vunpack.c.h.b16 %v161
    %v209 = vunpack.c.l.b16 %v162
    %v210 = vunpack.c.h.b16 %v162
    %v211 = vunpack.c.l.b16 %v163
    %v212 = vunpack.c.h.b16 %v163
    %v213 = vunpack.c.l.b16 %v164
    %v214 = vunpack.c.h.b16 %v164
    %v215 = vunpack.c.l.b16 %v165
    %v216 = vunpack.c.h.b16 %v165
    %v217 = vunpack.c.l.b16 %v166
    %v218 = vunpack.c.h.b16 %v166
    %v219 = vunpack.c.l.b16 %v167
    %v220 = vunpack.c.h.b16 %v167
    %v221 = vunpack.c.l.b16 %v168
    %v222 = vunpack.c.h.b16 %v168
    %v223 = vunpack.c.l.b16 %v169
    %v224 = vunpack.c.h.b16 %v169
    %v225 = vunpack.c.l.b16 %v170
    %v226 = vunpack.c.h.b16 %v170
    %v227 = vunpack.c.l.b16 %v171
    %v228 = vunpack.c.h.b16 %v171
    %v229 = vunpack.c.l.b16 %v172
    %v230 = vunpack.c.h.b16 %v172
    %v231 = vunpack.c.l.b16 %v173
    %v232 = vunpack.c.h.b16 %v173
    %v233 = vunpack.c.l.b16 %v174
    %v234 = vunpack.c.h.b16 %v174
    %v235 = vpack.c.b16 %v205, %v203
    %v236 = vpack.c.b16 %v206, %v204
    %v237 = vpack.c.b16 %v209, %v207
    %v238 = vpack.c.b16 %v210, %v208
    %v239 = vpack.c.b16 %v213, %v211
    %v240 = vpack.c.b16 %v214, %v212
    %v241 = vpack.c.b16 %v217, %v215
    %v242 = vpack.c.b16 %v218, %v216
    %v243 = vpack.c.b16 %v221, %v219
    %v244 = vpack.c.b16 %v222, %v220
    %v245 = vpack.c.b16 %v225, %v223
    %v246 = vpack.c.b16 %v226, %v224
    %v247 = vpack.c.b16 %v229, %v227
    %v248 = vpack.c.b16 %v230, %v228
    %v249 = vpack.c.b16 %v233, %v231
    %v250 = vpack.c.b16 %v234, %v232
    %267 = vmatprep.subr.bf16.mxu0 %v250
    %268 = vmatpush1.bf16.msra.mxu0 %v249
    %269 = vmatprep.subr.bf16.mxu0 %v248
    %270 = vmatpush1.bf16.msra.mxu0 %v247
    %271 = vmatprep.subr.bf16.mxu0 %v246
    %272 = vmatpush1.bf16.msra.mxu0 %v245
    %273 = vmatprep.subr.bf16.mxu0 %v244
    %274 = vmatpush1.bf16.msra.mxu0 %v243
    %275 = vmatprep.subr.bf16.mxu0 %v242
    %276 = vmatpush1.bf16.msra.mxu0 %v241
    %277 = vmatprep.subr.bf16.mxu0 %v240
    %278 = vmatpush1.bf16.msra.mxu0 %v239
    %279 = vmatprep.subr.bf16.mxu0 %v238
    %280 = vmatpush1.bf16.msra.mxu0 %v237
    %281 = vmatprep.subr.bf16.mxu0 %v236
    %282 = vmatpush1.bf16.msra.mxu0 %v235
    %283 = vmatprep.subr.bf16.mxu0 0
    %284 = vmatpush2.bf16.msra.mxu0 0
    %285 = vmatprep.subr.bf16.mxu0 0
    %286 = vmatpush2.bf16.msra.mxu0 0
    %287 = vmatprep.subr.bf16.mxu0 0
    %288 = vmatpush2.bf16.msra.mxu0 0
    %289 = vmatprep.subr.bf16.mxu0 0
    %290 = vmatpush2.bf16.msra.mxu0 0
    %291 = vmatprep.subr.bf16.mxu0 0
    %292 = vmatpush2.bf16.msra.mxu0 0
    %293 = vmatprep.subr.bf16.mxu0 0
    %294 = vmatpush2.bf16.msra.mxu0 0
    %295 = vmatprep.subr.bf16.mxu0 0
    %296 = vmatpush2.bf16.msra.mxu0 0
    %297 = vmatprep.subr.bf16.mxu0 0
    %298 = vmatpush2.bf16.msra.mxu0 0
    %299 = vmatprep.mubr.bf16.mxu0 0
    %300 = vmatmul.mubr.bf16.gmra.mxu0 %v127
    %v301 = vpop.f32.mrf.mxu0
    %v302 = vadd.f32 %v180, %v301
    %v303 = vpop.f32.mrf.mxu0
    %v304 = vadd.f32 %v184, %v303
    %v305 = vpop.f32.mrf.mxu0
    %v306 = vadd.f32 %v180, %v305
    %v307 = vpop.f32.mrf.mxu0
    %v308 = vadd.f32 %v184, %v307
    %309 = vmatprep.mubr.bf16.mxu0 0
    %310 = vmatmul.mubr.bf16.gmra.mxu0 %v128
    %v311 = vpop.f32.mrf.mxu0
    %v312 = vadd.f32 %v180, %v311
    %v313 = vpop.f32.mrf.mxu0
    %v314 = vadd.f32 %v184, %v313
    %v315 = vpop.f32.mrf.mxu0
    %v316 = vadd.f32 %v180, %v315
    %v317 = vpop.f32.mrf.mxu0
    %v318 = vadd.f32 %v184, %v317
    %319 = vmatprep.mubr.bf16.mxu0 0
    %320 = vmatmul.mubr.bf16.gmra.mxu0 %v129
    %v321 = vpop.f32.mrf.mxu0
    %v322 = vadd.f32 %v180, %v321
    %v323 = vpop.f32.mrf.mxu0
    %v324 = vadd.f32 %v184, %v323
    %v325 = vpop.f32.mrf.mxu0
    %v326 = vadd.f32 %v180, %v325
    %v327 = vpop.f32.mrf.mxu0
    %v328 = vadd.f32 %v184, %v327
    %329 = vmatprep.mubr.bf16.mxu0 0
    %330 = vmatmul.mubr.bf16.gmra.mxu0 %v130
    %v331 = vpop.f32.mrf.mxu0
    %v332 = vadd.f32 %v180, %v331
    %v333 = vpop.f32.mrf.mxu0
    %v334 = vadd.f32 %v184, %v333
    %v335 = vpop.f32.mrf.mxu0
    %v336 = vadd.f32 %v180, %v335
    %v337 = vpop.f32.mrf.mxu0
    %v338 = vadd.f32 %v184, %v337
    %339 = vmatprep.mubr.bf16.mxu0 0
    %340 = vmatmul.mubr.bf16.gmra.mxu0 %v131
    %v341 = vpop.f32.mrf.mxu0
    %v342 = vadd.f32 %v180, %v341
    %v343 = vpop.f32.mrf.mxu0
    %v344 = vadd.f32 %v184, %v343
    %v345 = vpop.f32.mrf.mxu0
    %v346 = vadd.f32 %v180, %v345
    %v347 = vpop.f32.mrf.mxu0
    %v348 = vadd.f32 %v184, %v347
    %349 = vmatprep.mubr.bf16.mxu0 0
    %350 = vmatmul.mubr.bf16.gmra.mxu0 %v132
    %v351 = vpop.f32.mrf.mxu0
    %v352 = vadd.f32 %v180, %v351
    %v353 = vpop.f32.mrf.mxu0
    %v354 = vadd.f32 %v184, %v353
    %v355 = vpop.f32.mrf.mxu0
    %v356 = vadd.f32 %v180, %v355
    %v357 = vpop.f32.mrf.mxu0
    %v358 = vadd.f32 %v184, %v357
    %359 = vmatprep.mubr.bf16.mxu0 0
    %360 = vmatmul.mubr.bf16.gmra.mxu0 %v133
    %v361 = vpop.f32.mrf.mxu0
    %v362 = vadd.f32 %v180, %v361
    %v363 = vpop.f32.mrf.mxu0
    %v364 = vadd.f32 %v184, %v363
    %v365 = vpop.f32.mrf.mxu0
    %v366 = vadd.f32 %v180, %v365
    %v367 = vpop.f32.mrf.mxu0
    %v368 = vadd.f32 %v184, %v367
    %369 = vmatprep.mubr.bf16.mxu0 0
    %370 = vmatmul.mubr.bf16.gmra.mxu0 %v134
    %v371 = vpop.f32.mrf.mxu0
    %v372 = vadd.f32 %v180, %v371
    %v373 = vpop.f32.mrf.mxu0
    %v374 = vadd.f32 %v184, %v373
    %v375 = vpop.f32.mrf.mxu0
    %v376 = vadd.f32 %v180, %v375
    %v377 = vpop.f32.mrf.mxu0
    %v378 = vadd.f32 %v184, %v377
    %379 = vmatprep.mubr.bf16.mxu0 0
    %380 = vmatmul.mubr.bf16.gmra.mxu0 %v135
    %v381 = vpop.f32.mrf.mxu0
    %v382 = vadd.f32 %v180, %v381
    %v383 = vpop.f32.mrf.mxu0
    %v384 = vadd.f32 %v184, %v383
    %v385 = vpop.f32.mrf.mxu0
    %v386 = vadd.f32 %v180, %v385
    %v387 = vpop.f32.mrf.mxu0
    %v388 = vadd.f32 %v184, %v387
    %389 = vmatprep.mubr.bf16.mxu0 0
    %390 = vmatmul.mubr.bf16.gmra.mxu0 %v136
    %v391 = vpop.f32.mrf.mxu0
    %v392 = vadd.f32 %v180, %v391
    %v393 = vpop.f32.mrf.mxu0
    %v394 = vadd.f32 %v184, %v393
    %v395 = vpop.f32.mrf.mxu0
    %v396 = vadd.f32 %v180, %v395
    %v397 = vpop.f32.mrf.mxu0
    %v398 = vadd.f32 %v184, %v397
    %399 = vmatprep.mubr.bf16.mxu0 0
    %400 = vmatmul.mubr.bf16.gmra.mxu0 %v137
    %v401 = vpop.f32.mrf.mxu0
    %v402 = vadd.f32 %v180, %v401
    %v403 = vpop.f32.mrf.mxu0
    %v404 = vadd.f32 %v184, %v403
    %v405 = vpop.f32.mrf.mxu0
    %v406 = vadd.f32 %v180, %v405
    %v407 = vpop.f32.mrf.mxu0
    %v408 = vadd.f32 %v184, %v407
    %409 = vmatprep.mubr.bf16.mxu0 0
    %410 = vmatmul.mubr.bf16.gmra.mxu0 %v138
    %v411 = vpop.f32.mrf.mxu0
    %v412 = vadd.f32 %v180, %v411
    %v413 = vpop.f32.mrf.mxu0
    %v414 = vadd.f32 %v184, %v413
    %v415 = vpop.f32.mrf.mxu0
    %v416 = vadd.f32 %v180, %v415
    %v417 = vpop.f32.mrf.mxu0
    %v418 = vadd.f32 %v184, %v417
    %419 = vmatprep.mubr.bf16.mxu0 0
    %420 = vmatmul.mubr.bf16.gmra.mxu0 %v139
    %v421 = vpop.f32.mrf.mxu0
    %v422 = vadd.f32 %v180, %v421
    %v423 = vpop.f32.mrf.mxu0
    %v424 = vadd.f32 %v184, %v423
    %v425 = vpop.f32.mrf.mxu0
    %v426 = vadd.f32 %v180, %v425
    %v427 = vpop.f32.mrf.mxu0
    %v428 = vadd.f32 %v184, %v427
    %429 = vmatprep.mubr.bf16.mxu0 0
    %430 = vmatmul.mubr.bf16.gmra.mxu0 %v140
    %v431 = vpop.f32.mrf.mxu0
    %v432 = vadd.f32 %v180, %v431
    %v433 = vpop.f32.mrf.mxu0
    %v434 = vadd.f32 %v184, %v433
    %v435 = vpop.f32.mrf.mxu0
    %v436 = vadd.f32 %v180, %v435
    %v437 = vpop.f32.mrf.mxu0
    %v438 = vadd.f32 %v184, %v437
    %439 = vmatprep.mubr.bf16.mxu0 0
    %440 = vmatmul.mubr.bf16.gmra.mxu0 %v141
    %v441 = vpop.f32.mrf.mxu0
    %v442 = vadd.f32 %v180, %v441
    %v443 = vpop.f32.mrf.mxu0
    %v444 = vadd.f32 %v184, %v443
    %v445 = vpop.f32.mrf.mxu0
    %v446 = vadd.f32 %v180, %v445
    %v447 = vpop.f32.mrf.mxu0
    %v448 = vadd.f32 %v184, %v447
    %449 = vmatprep.mubr.bf16.mxu0 0
    %450 = vmatmul.mubr.bf16.gmra.mxu0 %v142
    %v451 = vpop.f32.mrf.mxu0
    %v452 = vadd.f32 %v180, %v451
    %v453 = vpop.f32.mrf.mxu0
    %v454 = vadd.f32 %v184, %v453
    %v455 = vpop.f32.mrf.mxu0
    %v456 = vadd.f32 %v180, %v455
    %v457 = vpop.f32.mrf.mxu0
    %v458 = vadd.f32 %v184, %v457
    %459 = vmatprep.mubr.bf16.mxu0 0
    %460 = vmatmul.mubr.bf16.gmra.mxu0 %v143
    %v461 = vpop.f32.mrf.mxu0
    %v462 = vadd.f32 %v180, %v461
    %v463 = vpop.f32.mrf.mxu0
    %v464 = vadd.f32 %v184, %v463
    %v465 = vpop.f32.mrf.mxu0
    %v466 = vadd.f32 %v180, %v465
    %v467 = vpop.f32.mrf.mxu0
    %v468 = vadd.f32 %v184, %v467
    %469 = vmatprep.mubr.bf16.mxu0 0
    %470 = vmatmul.mubr.bf16.gmra.mxu0 %v144
    %v471 = vpop.f32.mrf.mxu0
    %v472 = vadd.f32 %v180, %v471
    %v473 = vpop.f32.mrf.mxu0
    %v474 = vadd.f32 %v184, %v473
    %v475 = vpop.f32.mrf.mxu0
    %v476 = vadd.f32 %v180, %v475
    %v477 = vpop.f32.mrf.mxu0
    %v478 = vadd.f32 %v184, %v477
    %479 = vmatprep.mubr.bf16.mxu0 0
    %480 = vmatmul.mubr.bf16.gmra.mxu0 %v145
    %v481 = vpop.f32.mrf.mxu0
    %v482 = vadd.f32 %v180, %v481
    %v483 = vpop.f32.mrf.mxu0
    %v484 = vadd.f32 %v184, %v483
    %v485 = vpop.f32.mrf.mxu0
    %v486 = vadd.f32 %v180, %v485
    %v487 = vpop.f32.mrf.mxu0
    %v488 = vadd.f32 %v184, %v487
    %489 = vmatprep.mubr.bf16.mxu0 0
    %490 = vmatmul.mubr.bf16.gmra.mxu0 %v146
    %v491 = vpop.f32.mrf.mxu0
    %v492 = vadd.f32 %v180, %v491
    %v493 = vpop.f32.mrf.mxu0
    %v494 = vadd.f32 %v184, %v493
    %v495 = vpop.f32.mrf.mxu0
    %v496 = vadd.f32 %v180, %v495
    %v497 = vpop.f32.mrf.mxu0
    %v498 = vadd.f32 %v184, %v497
    %499 = vmatprep.mubr.bf16.mxu0 0
    %500 = vmatmul.mubr.bf16.gmra.mxu0 %v147
    %v501 = vpop.f32.mrf.mxu0
    %v502 = vadd.f32 %v180, %v501
    %v503 = vpop.f32.mrf.mxu0
    %v504 = vadd.f32 %v184, %v503
    %v505 = vpop.f32.mrf.mxu0
    %v506 = vadd.f32 %v180, %v505
    %v507 = vpop.f32.mrf.mxu0
    %v508 = vadd.f32 %v184, %v507
    %509 = vmatprep.mubr.bf16.mxu0 0
    %510 = vmatmul.mubr.bf16.gmra.mxu0 %v148
    %v511 = vpop.f32.mrf.mxu0
    %v512 = vadd.f32 %v180, %v511
    %v513 = vpop.f32.mrf.mxu0
    %v514 = vadd.f32 %v184, %v513
    %v515 = vpop.f32.mrf.mxu0
    %v516 = vadd.f32 %v180, %v515
    %v517 = vpop.f32.mrf.mxu0
    %v518 = vadd.f32 %v184, %v517
    %519 = vmatprep.mubr.bf16.mxu0 0
    %520 = vmatmul.mubr.bf16.gmra.mxu0 %v149
    %v521 = vpop.f32.mrf.mxu0
    %v522 = vadd.f32 %v180, %v521
    %v523 = vpop.f32.mrf.mxu0
    %v524 = vadd.f32 %v184, %v523
    %v525 = vpop.f32.mrf.mxu0
    %v526 = vadd.f32 %v180, %v525
    %v527 = vpop.f32.mrf.mxu0
    %v528 = vadd.f32 %v184, %v527
    %529 = vmatprep.mubr.bf16.mxu0 0
    %530 = vmatmul.mubr.bf16.gmra.mxu0 %v150
    %v531 = vpop.f32.mrf.mxu0
    %v532 = vadd.f32 %v180, %v531
    %v533 = vpop.f32.mrf.mxu0
    %v534 = vadd.f32 %v184, %v533
    %v535 = vpop.f32.mrf.mxu0
    %v536 = vadd.f32 %v180, %v535
    %v537 = vpop.f32.mrf.mxu0
    %v538 = vadd.f32 %v184, %v537
    %539 = vmatprep.mubr.bf16.mxu0 0
    %540 = vmatmul.mubr.bf16.gmra.mxu0 %v151
    %v541 = vpop.f32.mrf.mxu0
    %v542 = vadd.f32 %v180, %v541
    %v543 = vpop.f32.mrf.mxu0
    %v544 = vadd.f32 %v184, %v543
    %v545 = vpop.f32.mrf.mxu0
    %v546 = vadd.f32 %v180, %v545
    %v547 = vpop.f32.mrf.mxu0
    %v548 = vadd.f32 %v184, %v547
    %549 = vmatprep.mubr.bf16.mxu0 0
    %550 = vmatmul.mubr.bf16.gmra.mxu0 %v152
    %v551 = vpop.f32.mrf.mxu0
    %v552 = vadd.f32 %v180, %v551
    %v553 = vpop.f32.mrf.mxu0
    %v554 = vadd.f32 %v184, %v553
    %v555 = vpop.f32.mrf.mxu0
    %v556 = vadd.f32 %v180, %v555
    %v557 = vpop.f32.mrf.mxu0
    %v558 = vadd.f32 %v184, %v557
    %559 = vmatprep.mubr.bf16.mxu0 0
    %560 = vmatmul.mubr.bf16.gmra.mxu0 %v153
    %v561 = vpop.f32.mrf.mxu0
    %v562 = vadd.f32 %v180, %v561
    %v563 = vpop.f32.mrf.mxu0
    %v564 = vadd.f32 %v184, %v563
    %v565 = vpop.f32.mrf.mxu0
    %v566 = vadd.f32 %v180, %v565
    %v567 = vpop.f32.mrf.mxu0
    %v568 = vadd.f32 %v184, %v567
    %569 = vmatprep.mubr.bf16.mxu0 0
    %570 = vmatmul.mubr.bf16.gmra.mxu0 %v154
    %v571 = vpop.f32.mrf.mxu0
    %v572 = vadd.f32 %v180, %v571
    %v573 = vpop.f32.mrf.mxu0
    %v574 = vadd.f32 %v184, %v573
    %v575 = vpop.f32.mrf.mxu0
    %v576 = vadd.f32 %v180, %v575
    %v577 = vpop.f32.mrf.mxu0
    %v578 = vadd.f32 %v184, %v577
    %579 = vmatprep.mubr.bf16.mxu0 0
    %580 = vmatmul.mubr.bf16.gmra.mxu0 %v155
    %v581 = vpop.f32.mrf.mxu0
    %v582 = vadd.f32 %v180, %v581
    %v583 = vpop.f32.mrf.mxu0
    %v584 = vadd.f32 %v184, %v583
    %v585 = vpop.f32.mrf.mxu0
    %v586 = vadd.f32 %v180, %v585
    %v587 = vpop.f32.mrf.mxu0
    %v588 = vadd.f32 %v184, %v587
    %589 = vmatprep.mubr.bf16.mxu0 0
    %590 = vmatmul.mubr.bf16.gmra.mxu0 %v156
    %v591 = vpop.f32.mrf.mxu0
    %v592 = vadd.f32 %v180, %v591
    %v593 = vpop.f32.mrf.mxu0
    %v594 = vadd.f32 %v184, %v593
    %v595 = vpop.f32.mrf.mxu0
    %v596 = vadd.f32 %v180, %v595
    %v597 = vpop.f32.mrf.mxu0
    %v598 = vadd.f32 %v184, %v597
    %599 = vmatprep.mubr.bf16.mxu0 0
    %600 = vmatmul.mubr.bf16.gmra.mxu0 %v157
    %v601 = vpop.f32.mrf.mxu0
    %v602 = vadd.f32 %v180, %v601
    %v603 = vpop.f32.mrf.mxu0
    %v604 = vadd.f32 %v184, %v603
    %v605 = vpop.f32.mrf.mxu0
    %v606 = vadd.f32 %v180, %v605
    %v607 = vpop.f32.mrf.mxu0
    %v608 = vadd.f32 %v184, %v607
    %609 = vmatprep.mubr.bf16.mxu0 0
    %610 = vmatmul.mubr.bf16.gmra.mxu0 %v158
    %v611 = vpop.f32.mrf.mxu0
    %v612 = vadd.f32 %v180, %v611
    %v613 = vpop.f32.mrf.mxu0
    %v614 = vadd.f32 %v184, %v613
    %v615 = vpop.f32.mrf.mxu0
    %v616 = vadd.f32 %v180, %v615
    %v617 = vpop.f32.mrf.mxu0
    %v618 = vadd.f32 %v184, %v617
    %619 = vdwg.mxu0
    %v620 = vmul.f32 %v302, 0.5
    %v621 = vmul.f32 %v304, 0.5
    %v622 = vmul.f32 %v306, 0.5
    %v623 = vmul.f32 %v308, 0.5
    %v624 = vmul.f32 %v312, 0.5
    %v625 = vmul.f32 %v314, 0.5
    %v626 = vmul.f32 %v316, 0.5
    %v627 = vmul.f32 %v318, 0.5
    %v628 = vmul.f32 %v322, 0.5
    %v629 = vmul.f32 %v324, 0.5
    %v630 = vmul.f32 %v326, 0.5
    %v631 = vmul.f32 %v328, 0.5
    %v632 = vmul.f32 %v332, 0.5
    %v633 = vmul.f32 %v334, 0.5
    %v634 = vmul.f32 %v336, 0.5
    %v635 = vmul.f32 %v338, 0.5
    %v636 = vmul.f32 %v342, 0.5
    %v637 = vmul.f32 %v344, 0.5
    %v638 = vmul.f32 %v346, 0.5
    %v639 = vmul.f32 %v348, 0.5
    %v640 = vmul.f32 %v352, 0.5
    %v641 = vmul.f32 %v354, 0.5
    %v642 = vmul.f32 %v356, 0.5
    %v643 = vmul.f32 %v358, 0.5
    %v644 = vmul.f32 %v362, 0.5
    %v645 = vmul.f32 %v364, 0.5
    %v646 = vmul.f32 %v366, 0.5
    %v647 = vmul.f32 %v368, 0.5
    %v648 = vmul.f32 %v372, 0.5
    %v649 = vmul.f32 %v374, 0.5
    %v650 = vmul.f32 %v376, 0.5
    %v651 = vmul.f32 %v378, 0.5
    %v652 = vmul.f32 %v382, 0.5
    %v653 = vmul.f32 %v384, 0.5
    %v654 = vmul.f32 %v386, 0.5
    %v655 = vmul.f32 %v388, 0.5
    %v656 = vmul.f32 %v392, 0.5
    %v657 = vmul.f32 %v394, 0.5
    %v658 = vmul.f32 %v396, 0.5
    %v659 = vmul.f32 %v398, 0.5
    %v660 = vmul.f32 %v402, 0.5
    %v661 = vmul.f32 %v404, 0.5
    %v662 = vmul.f32 %v406, 0.5
    %v663 = vmul.f32 %v408, 0.5
    %v664 = vmul.f32 %v412, 0.5
    %v665 = vmul.f32 %v414, 0.5
    %v666 = vmul.f32 %v416, 0.5
    %v667 = vmul.f32 %v418, 0.5
    %v668 = vmul.f32 %v422, 0.5
    %v669 = vmul.f32 %v424, 0.5
    %v670 = vmul.f32 %v426, 0.5
    %v671 = vmul.f32 %v428, 0.5
    %v672 = vmul.f32 %v432, 0.5
    %v673 = vmul.f32 %v434, 0.5
    %v674 = vmul.f32 %v436, 0.5
    %v675 = vmul.f32 %v438, 0.5
    %v676 = vmul.f32 %v442, 0.5
    %v677 = vmul.f32 %v444, 0.5
    %v678 = vmul.f32 %v446, 0.5
    %v679 = vmul.f32 %v448, 0.5
    %v680 = vmul.f32 %v452, 0.5
    %v681 = vmul.f32 %v454, 0.5
    %v682 = vmul.f32 %v456, 0.5
    %v683 = vmul.f32 %v458, 0.5
    %v684 = vmul.f32 %v462, 0.5
    %v685 = vmul.f32 %v464, 0.5
    %v686 = vmul.f32 %v466, 0.5
    %v687 = vmul.f32 %v468, 0.5
    %v688 = vmul.f32 %v472, 0.5
    %v689 = vmul.f32 %v474, 0.5
    %v690 = vmul.f32 %v476, 0.5
    %v691 = vmul.f32 %v478, 0.5
    %v692 = vmul.f32 %v482, 0.5
    %v693 = vmul.f32 %v484, 0.5
    %v694 = vmul.f32 %v486, 0.5
    %v695 = vmul.f32 %v488, 0.5
    %v696 = vmul.f32 %v492, 0.5
    %v697 = vmul.f32 %v494, 0.5
    %v698 = vmul.f32 %v496, 0.5
    %v699 = vmul.f32 %v498, 0.5
    %v700 = vmul.f32 %v502, 0.5
    %v701 = vmul.f32 %v504, 0.5
    %v702 = vmul.f32 %v506, 0.5
    %v703 = vmul.f32 %v508, 0.5
    %v704 = vmul.f32 %v512, 0.5
    %v705 = vmul.f32 %v514, 0.5
    %v706 = vmul.f32 %v516, 0.5
    %v707 = vmul.f32 %v518, 0.5
    %v708 = vmul.f32 %v522, 0.5
    %v709 = vmul.f32 %v524, 0.5
    %v710 = vmul.f32 %v526, 0.5
    %v711 = vmul.f32 %v528, 0.5
    %v712 = vmul.f32 %v532, 0.5
    %v713 = vmul.f32 %v534, 0.5
    %v714 = vmul.f32 %v536, 0.5
    %v715 = vmul.f32 %v538, 0.5
    %v716 = vmul.f32 %v542, 0.5
    %v717 = vmul.f32 %v544, 0.5
    %v718 = vmul.f32 %v546, 0.5
    %v719 = vmul.f32 %v548, 0.5
    %v720 = vmul.f32 %v552, 0.5
    %v721 = vmul.f32 %v554, 0.5
    %v722 = vmul.f32 %v556, 0.5
    %v723 = vmul.f32 %v558, 0.5
    %v724 = vmul.f32 %v562, 0.5
    %v725 = vmul.f32 %v564, 0.5
    %v726 = vmul.f32 %v566, 0.5
    %v727 = vmul.f32 %v568, 0.5
    %v728 = vmul.f32 %v572, 0.5
    %v729 = vmul.f32 %v574, 0.5
    %v730 = vmul.f32 %v576, 0.5
    %v731 = vmul.f32 %v578, 0.5
    %v732 = vmul.f32 %v582, 0.5
    %v733 = vmul.f32 %v584, 0.5
    %v734 = vmul.f32 %v586, 0.5
    %v735 = vmul.f32 %v588, 0.5
    %v736 = vmul.f32 %v592, 0.5
    %v737 = vmul.f32 %v594, 0.5
    %v738 = vmul.f32 %v596, 0.5
    %v739 = vmul.f32 %v598, 0.5
    %v740 = vmul.f32 %v602, 0.5
    %v741 = vmul.f32 %v604, 0.5
    %v742 = vmul.f32 %v606, 0.5
    %v743 = vmul.f32 %v608, 0.5
    %v744 = vmul.f32 %v612, 0.5
    %v745 = vmul.f32 %v614, 0.5
    %v746 = vmul.f32 %v616, 0.5
    %v747 = vmul.f32 %v618, 0.5
    %v748 = vmul.f32 %v302, 0.044715
    %v749 = vmul.f32 %v304, 0.044715
    %v750 = vmul.f32 %v306, 0.044715
    %v751 = vmul.f32 %v308, 0.044715
    %v752 = vmul.f32 %v312, 0.044715
    %v753 = vmul.f32 %v314, 0.044715
    %v754 = vmul.f32 %v316, 0.044715
    %v755 = vmul.f32 %v318, 0.044715
    %v756 = vmul.f32 %v322, 0.044715
    %v757 = vmul.f32 %v324, 0.044715
    %v758 = vmul.f32 %v326, 0.044715
    %v759 = vmul.f32 %v328, 0.044715
    %v760 = vmul.f32 %v332, 0.044715
    %v761 = vmul.f32 %v334, 0.044715
    %v762 = vmul.f32 %v336, 0.044715
    %v763 = vmul.f32 %v338, 0.044715
    %v764 = vmul.f32 %v342, 0.044715
    %v765 = vmul.f32 %v344, 0.044715
    %v766 = vmul.f32 %v346, 0.044715
    %v767 = vmul.f32 %v348, 0.044715
    %v768 = vmul.f32 %v352, 0.044715
    %v769 = vmul.f32 %v354, 0.044715
    %v770 = vmul.f32 %v356, 0.044715
    %v771 = vmul.f32 %v358, 0.044715
    %v772 = vmul.f32 %v362, 0.044715
    %v773 = vmul.f32 %v364, 0.044715
    %v774 = vmul.f32 %v366, 0.044715
    %v775 = vmul.f32 %v368, 0.044715
    %v776 = vmul.f32 %v372, 0.044715
    %v777 = vmul.f32 %v374, 0.044715
    %v778 = vmul.f32 %v376, 0.044715
    %v779 = vmul.f32 %v378, 0.044715
    %v780 = vmul.f32 %v382, 0.044715
    %v781 = vmul.f32 %v384, 0.044715
    %v782 = vmul.f32 %v386, 0.044715
    %v783 = vmul.f32 %v388, 0.044715
    %v784 = vmul.f32 %v392, 0.044715
    %v785 = vmul.f32 %v394, 0.044715
    %v786 = vmul.f32 %v396, 0.044715
    %v787 = vmul.f32 %v398, 0.044715
    %v788 = vmul.f32 %v402, 0.044715
    %v789 = vmul.f32 %v404, 0.044715
    %v790 = vmul.f32 %v406, 0.044715
    %v791 = vmul.f32 %v408, 0.044715
    %v792 = vmul.f32 %v412, 0.044715
    %v793 = vmul.f32 %v414, 0.044715
    %v794 = vmul.f32 %v416, 0.044715
    %v795 = vmul.f32 %v418, 0.044715
    %v796 = vmul.f32 %v422, 0.044715
    %v797 = vmul.f32 %v424, 0.044715
    %v798 = vmul.f32 %v426, 0.044715
    %v799 = vmul.f32 %v428, 0.044715
    %v800 = vmul.f32 %v432, 0.044715
    %v801 = vmul.f32 %v434, 0.044715
    %v802 = vmul.f32 %v436, 0.044715
    %v803 = vmul.f32 %v438, 0.044715
    %v804 = vmul.f32 %v442, 0.044715
    %v805 = vmul.f32 %v444, 0.044715
    %v806 = vmul.f32 %v446, 0.044715
    %v807 = vmul.f32 %v448, 0.044715
    %v808 = vmul.f32 %v452, 0.044715
    %v809 = vmul.f32 %v454, 0.044715
    %v810 = vmul.f32 %v456, 0.044715
    %v811 = vmul.f32 %v458, 0.044715
    %v812 = vmul.f32 %v462, 0.044715
    %v813 = vmul.f32 %v464, 0.044715
    %v814 = vmul.f32 %v466, 0.044715
    %v815 = vmul.f32 %v468, 0.044715
    %v816 = vmul.f32 %v472, 0.044715
    %v817 = vmul.f32 %v474, 0.044715
    %v818 = vmul.f32 %v476, 0.044715
    %v819 = vmul.f32 %v478, 0.044715
    %v820 = vmul.f32 %v482, 0.044715
    %v821 = vmul.f32 %v484, 0.044715
    %v822 = vmul.f32 %v486, 0.044715
    %v823 = vmul.f32 %v488, 0.044715
    %v824 = vmul.f32 %v492, 0.044715
    %v825 = vmul.f32 %v494, 0.044715
    %v826 = vmul.f32 %v496, 0.044715
    %v827 = vmul.f32 %v498, 0.044715
    %v828 = vmul.f32 %v502, 0.044715
    %v829 = vmul.f32 %v504, 0.044715
    %v830 = vmul.f32 %v506, 0.044715
    %v831 = vmul.f32 %v508, 0.044715
    %v832 = vmul.f32 %v512, 0.044715
    %v833 = vmul.f32 %v514, 0.044715
    %v834 = vmul.f32 %v516, 0.044715
    %v835 = vmul.f32 %v518, 0.044715
    %v836 = vmul.f32 %v522, 0.044715
    %v837 = vmul.f32 %v524, 0.044715
    %v838 = vmul.f32 %v526, 0.044715
    %v839 = vmul.f32 %v528, 0.044715
    %v840 = vmul.f32 %v532, 0.044715
    %v841 = vmul.f32 %v534, 0.044715
    %v842 = vmul.f32 %v536, 0.044715
    %v843 = vmul.f32 %v538, 0.044715
    %v844 = vmul.f32 %v542, 0.044715
    %v845 = vmul.f32 %v544, 0.044715
    %v846 = vmul.f32 %v546, 0.044715
    %v847 = vmul.f32 %v548, 0.044715
    %v848 = vmul.f32 %v552, 0.044715
    %v849 = vmul.f32 %v554, 0.044715
    %v850 = vmul.f32 %v556, 0.044715
    %v851 = vmul.f32 %v558, 0.044715
    %v852 = vmul.f32 %v562, 0.044715
    %v853 = vmul.f32 %v564, 0.044715
    %v854 = vmul.f32 %v566, 0.044715
    %v855 = vmul.f32 %v568, 0.044715
    %v856 = vmul.f32 %v572, 0.044715
    %v857 = vmul.f32 %v574, 0.044715
    %v858 = vmul.f32 %v576, 0.044715
    %v859 = vmul.f32 %v578, 0.044715
    %v860 = vmul.f32 %v582, 0.044715
    %v861 = vmul.f32 %v584, 0.044715
    %v862 = vmul.f32 %v586, 0.044715
    %v863 = vmul.f32 %v588, 0.044715
    %v864 = vmul.f32 %v592, 0.044715
    %v865 = vmul.f32 %v594, 0.044715
    %v866 = vmul.f32 %v596, 0.044715
    %v867 = vmul.f32 %v598, 0.044715
    %v868 = vmul.f32 %v602, 0.044715
    %v869 = vmul.f32 %v604, 0.044715
    %v870 = vmul.f32 %v606, 0.044715
    %v871 = vmul.f32 %v608, 0.044715
    %v872 = vmul.f32 %v612, 0.044715
    %v873 = vmul.f32 %v614, 0.044715
    %v874 = vmul.f32 %v616, 0.044715
    %v875 = vmul.f32 %v618, 0.044715
    %v876 = vmul.f32 %v748, %v302
    %v877 = vmul.f32 %v749, %v304
    %v878 = vmul.f32 %v750, %v306
    %v879 = vmul.f32 %v751, %v308
    %v880 = vmul.f32 %v752, %v312
    %v881 = vmul.f32 %v753, %v314
    %v882 = vmul.f32 %v754, %v316
    %v883 = vmul.f32 %v755, %v318
    %v884 = vmul.f32 %v756, %v322
    %v885 = vmul.f32 %v757, %v324
    %v886 = vmul.f32 %v758, %v326
    %v887 = vmul.f32 %v759, %v328
    %v888 = vmul.f32 %v760, %v332
    %v889 = vmul.f32 %v761, %v334
    %v890 = vmul.f32 %v762, %v336
    %v891 = vmul.f32 %v763, %v338
    %v892 = vmul.f32 %v764, %v342
    %v893 = vmul.f32 %v765, %v344
    %v894 = vmul.f32 %v766, %v346
    %v895 = vmul.f32 %v767, %v348
    %v896 = vmul.f32 %v768, %v352
    %v897 = vmul.f32 %v769, %v354
    %v898 = vmul.f32 %v770, %v356
    %v899 = vmul.f32 %v771, %v358
    %v900 = vmul.f32 %v772, %v362
    %v901 = vmul.f32 %v773, %v364
    %v902 = vmul.f32 %v774, %v366
    %v903 = vmul.f32 %v775, %v368
    %v904 = vmul.f32 %v776, %v372
    %v905 = vmul.f32 %v777, %v374
    %v906 = vmul.f32 %v778, %v376
    %v907 = vmul.f32 %v779, %v378
    %v908 = vmul.f32 %v780, %v382
    %v909 = vmul.f32 %v781, %v384
    %v910 = vmul.f32 %v782, %v386
    %v911 = vmul.f32 %v783, %v388
    %v912 = vmul.f32 %v784, %v392
    %v913 = vmul.f32 %v785, %v394
    %v914 = vmul.f32 %v786, %v396
    %v915 = vmul.f32 %v787, %v398
    %v916 = vmul.f32 %v788, %v402
    %v917 = vmul.f32 %v789, %v404
    %v918 = vmul.f32 %v790, %v406
    %v919 = vmul.f32 %v791, %v408
    %v920 = vmul.f32 %v792, %v412
    %v921 = vmul.f32 %v793, %v414
    %v922 = vmul.f32 %v794, %v416
    %v923 = vmul.f32 %v795, %v418
    %v924 = vmul.f32 %v796, %v422
    %v925 = vmul.f32 %v797, %v424
    %v926 = vmul.f32 %v798, %v426
    %v927 = vmul.f32 %v799, %v428
    %v928 = vmul.f32 %v800, %v432
    %v929 = vmul.f32 %v801, %v434
    %v930 = vmul.f32 %v802, %v436
    %v931 = vmul.f32 %v803, %v438
    %v932 = vmul.f32 %v804, %v442
    %v933 = vmul.f32 %v805, %v444
    %v934 = vmul.f32 %v806, %v446
    %v935 = vmul.f32 %v807, %v448
    %v936 = vmul.f32 %v808, %v452
    %v937 = vmul.f32 %v809, %v454
    %v938 = vmul.f32 %v810, %v456
    %v939 = vmul.f32 %v811, %v458
    %v940 = vmul.f32 %v812, %v462
    %v941 = vmul.f32 %v813, %v464
    %v942 = vmul.f32 %v814, %v466
    %v943 = vmul.f32 %v815, %v468
    %v944 = vmul.f32 %v816, %v472
    %v945 = vmul.f32 %v817, %v474
    %v946 = vmul.f32 %v818, %v476
    %v947 = vmul.f32 %v819, %v478
    %v948 = vmul.f32 %v820, %v482
    %v949 = vmul.f32 %v821, %v484
    %v950 = vmul.f32 %v822, %v486
    %v951 = vmul.f32 %v823, %v488
    %v952 = vmul.f32 %v824, %v492
    %v953 = vmul.f32 %v825, %v494
    %v954 = vmul.f32 %v826, %v496
    %v955 = vmul.f32 %v827, %v498
    %v956 = vmul.f32 %v828, %v502
    %v957 = vmul.f32 %v829, %v504
    %v958 = vmul.f32 %v830, %v506
    %v959 = vmul.f32 %v831, %v508
    %v960 = vmul.f32 %v832, %v512
    %v961 = vmul.f32 %v833, %v514
    %v962 = vmul.f32 %v834, %v516
    %v963 = vmul.f32 %v835, %v518
    %v964 = vmul.f32 %v836, %v522
    %v965 = vmul.f32 %v837, %v524
    %v966 = vmul.f32 %v838, %v526
    %v967 = vmul.f32 %v839, %v528
    %v968 = vmul.f32 %v840, %v532
    %v969 = vmul.f32 %v841, %v534
    %v970 = vmul.f32 %v842, %v536
    %v971 = vmul.f32 %v843, %v538
    %v972 = vmul.f32 %v844, %v542
    %v973 = vmul.f32 %v845, %v544
    %v974 = vmul.f32 %v846, %v546
    %v975 = vmul.f32 %v847, %v548
    %v976 = vmul.f32 %v848, %v552
    %v977 = vmul.f32 %v849, %v554
    %v978 = vmul.f32 %v850, %v556
    %v979 = vmul.f32 %v851, %v558
    %v980 = vmul.f32 %v852, %v562
    %v981 = vmul.f32 %v853, %v564
    %v982 = vmul.f32 %v854, %v566
    %v983 = vmul.f32 %v855, %v568
    %v984 = vmul.f32 %v856, %v572
    %v985 = vmul.f32 %v857, %v574
    %v986 = vmul.f32 %v858, %v576
    %v987 = vmul.f32 %v859, %v578
    %v988 = vmul.f32 %v860, %v582
    %v989 = vmul.f32 %v861, %v584
    %v990 = vmul.f32 %v862, %v586
    %v991 = vmul.f32 %v863, %v588
    %v992 = vmul.f32 %v864, %v592
    %v993 = vmul.f32 %v865, %v594
    %v994 = vmul.f32 %v866, %v596
    %v995 = vmul.f32 %v867, %v598
    %v996 = vmul.f32 %v868, %v602
    %v997 = vmul.f32 %v869, %v604
    %v998 = vmul.f32 %v870, %v606
    %v999 = vmul.f32 %v871, %v608
    %v1000 = vmul.f32 %v872, %v612
    %v1001 = vmul.f32 %v873, %v614
    %v1002 = vmul.f32 %v874, %v616
    %v1003 = vmul.f32 %v875, %v618
    %v1004 = vmul.f32 %v876, %v302
    %v1005 = vmul.f32 %v877, %v304
    %v1006 = vmul.f32 %v878, %v306
    %v1007 = vmul.f32 %v879, %v308
    %v1008 = vmul.f32 %v880, %v312
    %v1009 = vmul.f32 %v881, %v314
    %v1010 = vmul.f32 %v882, %v316
    %v1011 = vmul.f32 %v883, %v318
    %v1012 = vmul.f32 %v884, %v322
    %v1013 = vmul.f32 %v885, %v324
    %v1014 = vmul.f32 %v886, %v326
    %v1015 = vmul.f32 %v887, %v328
    %v1016 = vmul.f32 %v888, %v332
    %v1017 = vmul.f32 %v889, %v334
    %v1018 = vmul.f32 %v890, %v336
    %v1019 = vmul.f32 %v891, %v338
    %v1020 = vmul.f32 %v892, %v342
    %v1021 = vmul.f32 %v893, %v344
    %v1022 = vmul.f32 %v894, %v346
    %v1023 = vmul.f32 %v895, %v348
    %v1024 = vmul.f32 %v896, %v352
    %v1025 = vmul.f32 %v897, %v354
    %v1026 = vmul.f32 %v898, %v356
    %v1027 = vmul.f32 %v899, %v358
    %v1028 = vmul.f32 %v900, %v362
    %v1029 = vmul.f32 %v901, %v364
    %v1030 = vmul.f32 %v902, %v366
    %v1031 = vmul.f32 %v903, %v368
    %v1032 = vmul.f32 %v904, %v372
    %v1033 = vmul.f32 %v905, %v374
    %v1034 = vmul.f32 %v906, %v376
    %v1035 = vmul.f32 %v907, %v378
    %v1036 = vmul.f32 %v908, %v382
    %v1037 = vmul.f32 %v909, %v384
    %v1038 = vmul.f32 %v910, %v386
    %v1039 = vmul.f32 %v911, %v388
    %v1040 = vmul.f32 %v912, %v392
    %v1041 = vmul.f32 %v913, %v394
    %v1042 = vmul.f32 %v914, %v396
    %v1043 = vmul.f32 %v915, %v398
    %v1044 = vmul.f32 %v916, %v402
    %v1045 = vmul.f32 %v917, %v404
    %v1046 = vmul.f32 %v918, %v406
    %v1047 = vmul.f32 %v919, %v408
    %v1048 = vmul.f32 %v920, %v412
    %v1049 = vmul.f32 %v921, %v414
    %v1050 = vmul.f32 %v922, %v416
    %v1051 = vmul.f32 %v923, %v418
    %v1052 = vmul.f32 %v924, %v422
    %v1053 = vmul.f32 %v925, %v424
    %v1054 = vmul.f32 %v926, %v426
    %v1055 = vmul.f32 %v927, %v428
    %v1056 = vmul.f32 %v928, %v432
    %v1057 = vmul.f32 %v929, %v434
    %v1058 = vmul.f32 %v930, %v436
    %v1059 = vmul.f32 %v931, %v438
    %v1060 = vmul.f32 %v932, %v442
    %v1061 = vmul.f32 %v933, %v444
    %v1062 = vmul.f32 %v934, %v446
    %v1063 = vmul.f32 %v935, %v448
    %v1064 = vmul.f32 %v936, %v452
    %v1065 = vmul.f32 %v937, %v454
    %v1066 = vmul.f32 %v938, %v456
    %v1067 = vmul.f32 %v939, %v458
    %v1068 = vmul.f32 %v940, %v462
    %v1069 = vmul.f32 %v941, %v464
    %v1070 = vmul.f32 %v942, %v466
    %v1071 = vmul.f32 %v943, %v468
    %v1072 = vmul.f32 %v944, %v472
    %v1073 = vmul.f32 %v945, %v474
    %v1074 = vmul.f32 %v946, %v476
    %v1075 = vmul.f32 %v947, %v478
    %v1076 = vmul.f32 %v948, %v482
    %v1077 = vmul.f32 %v949, %v484
    %v1078 = vmul.f32 %v950, %v486
    %v1079 = vmul.f32 %v951, %v488
    %v1080 = vmul.f32 %v952, %v492
    %v1081 = vmul.f32 %v953, %v494
    %v1082 = vmul.f32 %v954, %v496
    %v1083 = vmul.f32 %v955, %v498
    %v1084 = vmul.f32 %v956, %v502
    %v1085 = vmul.f32 %v957, %v504
    %v1086 = vmul.f32 %v958, %v506
    %v1087 = vmul.f32 %v959, %v508
    %v1088 = vmul.f32 %v960, %v512
    %v1089 = vmul.f32 %v961, %v514
    %v1090 = vmul.f32 %v962, %v516
    %v1091 = vmul.f32 %v963, %v518
    %v1092 = vmul.f32 %v964, %v522
    %v1093 = vmul.f32 %v965, %v524
    %v1094 = vmul.f32 %v966, %v526
    %v1095 = vmul.f32 %v967, %v528
    %v1096 = vmul.f32 %v968, %v532
    %v1097 = vmul.f32 %v969, %v534
    %v1098 = vmul.f32 %v970, %v536
    %v1099 = vmul.f32 %v971, %v538
    %v1100 = vmul.f32 %v972, %v542
    %v1101 = vmul.f32 %v973, %v544
    %v1102 = vmul.f32 %v974, %v546
    %v1103 = vmul.f32 %v975, %v548
    %v1104 = vmul.f32 %v976, %v552
    %v1105 = vmul.f32 %v977, %v554
    %v1106 = vmul.f32 %v978, %v556
    %v1107 = vmul.f32 %v979, %v558
    %v1108 = vmul.f32 %v980, %v562
    %v1109 = vmul.f32 %v981, %v564
    %v1110 = vmul.f32 %v982, %v566
    %v1111 = vmul.f32 %v983, %v568
    %v1112 = vmul.f32 %v984, %v572
    %v1113 = vmul.f32 %v985, %v574
    %v1114 = vmul.f32 %v986, %v576
    %v1115 = vmul.f32 %v987, %v578
    %v1116 = vmul.f32 %v988, %v582
    %v1117 = vmul.f32 %v989, %v584
    %v1118 = vmul.f32 %v990, %v586
    %v1119 = vmul.f32 %v991, %v588
    %v1120 = vmul.f32 %v992, %v592
    %v1121 = vmul.f32 %v993, %v594
    %v1122 = vmul.f32 %v994, %v596
    %v1123 = vmul.f32 %v995, %v598
    %v1124 = vmul.f32 %v996, %v602
    %v1125 = vmul.f32 %v997, %v604
    %v1126 = vmul.f32 %v998, %v606
    %v1127 = vmul.f32 %v999, %v608
    %v1128 = vmul.f32 %v1000, %v612
    %v1129 = vmul.f32 %v1001, %v614
    %v1130 = vmul.f32 %v1002, %v616
    %v1131 = vmul.f32 %v1003, %v618
    %v1132 = vadd.f32 %v302, %v1004
    %v1133 = vadd.f32 %v304, %v1005
    %v1134 = vadd.f32 %v306, %v1006
    %v1135 = vadd.f32 %v308, %v1007
    %v1136 = vadd.f32 %v312, %v1008
    %v1137 = vadd.f32 %v314, %v1009
    %v1138 = vadd.f32 %v316, %v1010
    %v1139 = vadd.f32 %v318, %v1011
    %v1140 = vadd.f32 %v322, %v1012
    %v1141 = vadd.f32 %v324, %v1013
    %v1142 = vadd.f32 %v326, %v1014
    %v1143 = vadd.f32 %v328, %v1015
    %v1144 = vadd.f32 %v332, %v1016
    %v1145 = vadd.f32 %v334, %v1017
    %v1146 = vadd.f32 %v336, %v1018
    %v1147 = vadd.f32 %v338, %v1019
    %v1148 = vadd.f32 %v342, %v1020
    %v1149 = vadd.f32 %v344, %v1021
    %v1150 = vadd.f32 %v346, %v1022
    %v1151 = vadd.f32 %v348, %v1023
    %v1152 = vadd.f32 %v352, %v1024
    %v1153 = vadd.f32 %v354, %v1025
    %v1154 = vadd.f32 %v356, %v1026
    %v1155 = vadd.f32 %v358, %v1027
    %v1156 = vadd.f32 %v362, %v1028
    %v1157 = vadd.f32 %v364, %v1029
    %v1158 = vadd.f32 %v366, %v1030
    %v1159 = vadd.f32 %v368, %v1031
    %v1160 = vadd.f32 %v372, %v1032
    %v1161 = vadd.f32 %v374, %v1033
    %v1162 = vadd.f32 %v376, %v1034
    %v1163 = vadd.f32 %v378, %v1035
    %v1164 = vadd.f32 %v382, %v1036
    %v1165 = vadd.f32 %v384, %v1037
    %v1166 = vadd.f32 %v386, %v1038
    %v1167 = vadd.f32 %v388, %v1039
    %v1168 = vadd.f32 %v392, %v1040
    %v1169 = vadd.f32 %v394, %v1041
    %v1170 = vadd.f32 %v396, %v1042
    %v1171 = vadd.f32 %v398, %v1043
    %v1172 = vadd.f32 %v402, %v1044
    %v1173 = vadd.f32 %v404, %v1045
    %v1174 = vadd.f32 %v406, %v1046
    %v1175 = vadd.f32 %v408, %v1047
    %v1176 = vadd.f32 %v412, %v1048
    %v1177 = vadd.f32 %v414, %v1049
    %v1178 = vadd.f32 %v416, %v1050
    %v1179 = vadd.f32 %v418, %v1051
    %v1180 = vadd.f32 %v422, %v1052
    %v1181 = vadd.f32 %v424, %v1053
    %v1182 = vadd.f32 %v426, %v1054
    %v1183 = vadd.f32 %v428, %v1055
    %v1184 = vadd.f32 %v432, %v1056
    %v1185 = vadd.f32 %v434, %v1057
    %v1186 = vadd.f32 %v436, %v1058
    %v1187 = vadd.f32 %v438, %v1059
    %v1188 = vadd.f32 %v442, %v1060
    %v1189 = vadd.f32 %v444, %v1061
    %v1190 = vadd.f32 %v446, %v1062
    %v1191 = vadd.f32 %v448, %v1063
    %v1192 = vadd.f32 %v452, %v1064
    %v1193 = vadd.f32 %v454, %v1065
    %v1194 = vadd.f32 %v456, %v1066
    %v1195 = vadd.f32 %v458, %v1067
    %v1196 = vadd.f32 %v462, %v1068
    %v1197 = vadd.f32 %v464, %v1069
    %v1198 = vadd.f32 %v466, %v1070
    %v1199 = vadd.f32 %v468, %v1071
    %v1200 = vadd.f32 %v472, %v1072
    %v1201 = vadd.f32 %v474, %v1073
    %v1202 = vadd.f32 %v476, %v1074
    %v1203 = vadd.f32 %v478, %v1075
    %v1204 = vadd.f32 %v482, %v1076
    %v1205 = vadd.f32 %v484, %v1077
    %v1206 = vadd.f32 %v486, %v1078
    %v1207 = vadd.f32 %v488, %v1079
    %v1208 = vadd.f32 %v492, %v1080
    %v1209 = vadd.f32 %v494, %v1081
    %v1210 = vadd.f32 %v496, %v1082
    %v1211 = vadd.f32 %v498, %v1083
    %v1212 = vadd.f32 %v502, %v1084
    %v1213 = vadd.f32 %v504, %v1085
    %v1214 = vadd.f32 %v506, %v1086
    %v1215 = vadd.f32 %v508, %v1087
    %v1216 = vadd.f32 %v512, %v1088
    %v1217 = vadd.f32 %v514, %v1089
    %v1218 = vadd.f32 %v516, %v1090
    %v1219 = vadd.f32 %v518, %v1091
    %v1220 = vadd.f32 %v522, %v1092
    %v1221 = vadd.f32 %v524, %v1093
    %v1222 = vadd.f32 %v526, %v1094
    %v1223 = vadd.f32 %v528, %v1095
    %v1224 = vadd.f32 %v532, %v1096
    %v1225 = vadd.f32 %v534, %v1097
    %v1226 = vadd.f32 %v536, %v1098
    %v1227 = vadd.f32 %v538, %v1099
    %v1228 = vadd.f32 %v542, %v1100
    %v1229 = vadd.f32 %v544, %v1101
    %v1230 = vadd.f32 %v546, %v1102
    %v1231 = vadd.f32 %v548, %v1103
    %v1232 = vadd.f32 %v552, %v1104
    %v1233 = vadd.f32 %v554, %v1105
    %v1234 = vadd.f32 %v556, %v1106
    %v1235 = vadd.f32 %v558, %v1107
    %v1236 = vadd.f32 %v562, %v1108
    %v1237 = vadd.f32 %v564, %v1109
    %v1238 = vadd.f32 %v566, %v1110
    %v1239 = vadd.f32 %v568, %v1111
    %v1240 = vadd.f32 %v572, %v1112
    %v1241 = vadd.f32 %v574, %v1113
    %v1242 = vadd.f32 %v576, %v1114
    %v1243 = vadd.f32 %v578, %v1115
    %v1244 = vadd.f32 %v582, %v1116
    %v1245 = vadd.f32 %v584, %v1117
    %v1246 = vadd.f32 %v586, %v1118
    %v1247 = vadd.f32 %v588, %v1119
    %v1248 = vadd.f32 %v592, %v1120
    %v1249 = vadd.f32 %v594, %v1121
    %v1250 = vadd.f32 %v596, %v1122
    %v1251 = vadd.f32 %v598, %v1123
    %v1252 = vadd.f32 %v602, %v1124
    %v1253 = vadd.f32 %v604, %v1125
    %v1254 = vadd.f32 %v606, %v1126
    %v1255 = vadd.f32 %v608, %v1127
    %v1256 = vadd.f32 %v612, %v1128
    %v1257 = vadd.f32 %v614, %v1129
    %v1258 = vadd.f32 %v616, %v1130
    %v1259 = vadd.f32 %v618, %v1131
    %v1260 = vmul.f32 %v1132, 0.7978846
    %v1261 = vmul.f32 %v1133, 0.7978846
    %v1262 = vmul.f32 %v1134, 0.7978846
    %v1263 = vmul.f32 %v1135, 0.7978846
    %v1264 = vmul.f32 %v1136, 0.7978846
    %v1265 = vmul.f32 %v1137, 0.7978846
    %v1266 = vmul.f32 %v1138, 0.7978846
    %v1267 = vmul.f32 %v1139, 0.7978846
    %v1268 = vmul.f32 %v1140, 0.7978846
    %v1269 = vmul.f32 %v1141, 0.7978846
    %v1270 = vmul.f32 %v1142, 0.7978846
    %v1271 = vmul.f32 %v1143, 0.7978846
    %v1272 = vmul.f32 %v1144, 0.7978846
    %v1273 = vmul.f32 %v1145, 0.7978846
    %v1274 = vmul.f32 %v1146, 0.7978846
    %v1275 = vmul.f32 %v1147, 0.7978846
    %v1276 = vmul.f32 %v1148, 0.7978846
    %v1277 = vmul.f32 %v1149, 0.7978846
    %v1278 = vmul.f32 %v1150, 0.7978846
    %v1279 = vmul.f32 %v1151, 0.7978846
    %v1280 = vmul.f32 %v1152, 0.7978846
    %v1281 = vmul.f32 %v1153, 0.7978846
    %v1282 = vmul.f32 %v1154, 0.7978846
    %v1283 = vmul.f32 %v1155, 0.7978846
    %v1284 = vmul.f32 %v1156, 0.7978846
    %v1285 = vmul.f32 %v1157, 0.7978846
    %v1286 = vmul.f32 %v1158, 0.7978846
    %v1287 = vmul.f32 %v1159, 0.7978846
    %v1288 = vmul.f32 %v1160, 0.7978846
    %v1289 = vmul.f32 %v1161, 0.7978846
    %v1290 = vmul.f32 %v1162, 0.7978846
    %v1291 = vmul.f32 %v1163, 0.7978846
    %v1292 = vmul.f32 %v1164, 0.7978846
    %v1293 = vmul.f32 %v1165, 0.7978846
    %v1294 = vmul.f32 %v1166, 0.7978846
    %v1295 = vmul.f32 %v1167, 0.7978846
    %v1296 = vmul.f32 %v1168, 0.7978846
    %v1297 = vmul.f32 %v1169, 0.7978846
    %v1298 = vmul.f32 %v1170, 0.7978846
    %v1299 = vmul.f32 %v1171, 0.7978846
    %v1300 = vmul.f32 %v1172, 0.7978846
    %v1301 = vmul.f32 %v1173, 0.7978846
    %v1302 = vmul.f32 %v1174, 0.7978846
    %v1303 = vmul.f32 %v1175, 0.7978846
    %v1304 = vmul.f32 %v1176, 0.7978846
    %v1305 = vmul.f32 %v1177, 0.7978846
    %v1306 = vmul.f32 %v1178, 0.7978846
    %v1307 = vmul.f32 %v1179, 0.7978846
    %v1308 = vmul.f32 %v1180, 0.7978846
    %v1309 = vmul.f32 %v1181, 0.7978846
    %v1310 = vmul.f32 %v1182, 0.7978846
    %v1311 = vmul.f32 %v1183, 0.7978846
    %v1312 = vmul.f32 %v1184, 0.7978846
    %v1313 = vmul.f32 %v1185, 0.7978846
    %v1314 = vmul.f32 %v1186, 0.7978846
    %v1315 = vmul.f32 %v1187, 0.7978846
    %v1316 = vmul.f32 %v1188, 0.7978846
    %v1317 = vmul.f32 %v1189, 0.7978846
    %v1318 = vmul.f32 %v1190, 0.7978846
    %v1319 = vmul.f32 %v1191, 0.7978846
    %v1320 = vmul.f32 %v1192, 0.7978846
    %v1321 = vmul.f32 %v1193, 0.7978846
    %v1322 = vmul.f32 %v1194, 0.7978846
    %v1323 = vmul.f32 %v1195, 0.7978846
    %v1324 = vmul.f32 %v1196, 0.7978846
    %v1325 = vmul.f32 %v1197, 0.7978846
    %v1326 = vmul.f32 %v1198, 0.7978846
    %v1327 = vmul.f32 %v1199, 0.7978846
    %v1328 = vmul.f32 %v1200, 0.7978846
    %v1329 = vmul.f32 %v1201, 0.7978846
    %v1330 = vmul.f32 %v1202, 0.7978846
    %v1331 = vmul.f32 %v1203, 0.7978846
    %v1332 = vmul.f32 %v1204, 0.7978846
    %v1333 = vmul.f32 %v1205, 0.7978846
    %v1334 = vmul.f32 %v1206, 0.7978846
    %v1335 = vmul.f32 %v1207, 0.7978846
    %v1336 = vmul.f32 %v1208, 0.7978846
    %v1337 = vmul.f32 %v1209, 0.7978846
    %v1338 = vmul.f32 %v1210, 0.7978846
    %v1339 = vmul.f32 %v1211, 0.7978846
    %v1340 = vmul.f32 %v1212, 0.7978846
    %v1341 = vmul.f32 %v1213, 0.7978846
    %v1342 = vmul.f32 %v1214, 0.7978846
    %v1343 = vmul.f32 %v1215, 0.7978846
    %v1344 = vmul.f32 %v1216, 0.7978846
    %v1345 = vmul.f32 %v1217, 0.7978846
    %v1346 = vmul.f32 %v1218, 0.7978846
    %v1347 = vmul.f32 %v1219, 0.7978846
    %v1348 = vmul.f32 %v1220, 0.7978846
    %v1349 = vmul.f32 %v1221, 0.7978846
    %v1350 = vmul.f32 %v1222, 0.7978846
    %v1351 = vmul.f32 %v1223, 0.7978846
    %v1352 = vmul.f32 %v1224, 0.7978846
    %v1353 = vmul.f32 %v1225, 0.7978846
    %v1354 = vmul.f32 %v1226, 0.7978846
    %v1355 = vmul.f32 %v1227, 0.7978846
    %v1356 = vmul.f32 %v1228, 0.7978846
    %v1357 = vmul.f32 %v1229, 0.7978846
    %v1358 = vmul.f32 %v1230, 0.7978846
    %v1359 = vmul.f32 %v1231, 0.7978846
    %v1360 = vmul.f32 %v1232, 0.7978846
    %v1361 = vmul.f32 %v1233, 0.7978846
    %v1362 = vmul.f32 %v1234, 0.7978846
    %v1363 = vmul.f32 %v1235, 0.7978846
    %v1364 = vmul.f32 %v1236, 0.7978846
    %v1365 = vmul.f32 %v1237, 0.7978846
    %v1366 = vmul.f32 %v1238, 0.7978846
    %v1367 = vmul.f32 %v1239, 0.7978846
    %v1368 = vmul.f32 %v1240, 0.7978846
    %v1369 = vmul.f32 %v1241, 0.7978846
    %v1370 = vmul.f32 %v1242, 0.7978846
    %v1371 = vmul.f32 %v1243, 0.7978846
    %v1372 = vmul.f32 %v1244, 0.7978846
    %v1373 = vmul.f32 %v1245, 0.7978846
    %v1374 = vmul.f32 %v1246, 0.7978846
    %v1375 = vmul.f32 %v1247, 0.7978846
    %v1376 = vmul.f32 %v1248, 0.7978846
    %v1377 = vmul.f32 %v1249, 0.7978846
    %v1378 = vmul.f32 %v1250, 0.7978846
    %v1379 = vmul.f32 %v1251, 0.7978846
    %v1380 = vmul.f32 %v1252, 0.7978846
    %v1381 = vmul.f32 %v1253, 0.7978846
    %v1382 = vmul.f32 %v1254, 0.7978846
    %v1383 = vmul.f32 %v1255, 0.7978846
    %v1384 = vmul.f32 %v1256, 0.7978846
    %v1385 = vmul.f32 %v1257, 0.7978846
    %v1386 = vmul.f32 %v1258, 0.7978846
    %v1387 = vmul.f32 %v1259, 0.7978846
    %v1388 = vtanh.pop %v1260
    %v1389 = vtanh.pop %v1261
    %v1390 = vtanh.pop %v1262
    %v1391 = vtanh.pop %v1263
    %v1392 = vtanh.pop %v1264
    %v1393 = vtanh.pop %v1265
    %v1394 = vtanh.pop %v1266
    %v1395 = vtanh.pop %v1267
    %v1396 = vtanh.pop %v1268
    %v1397 = vtanh.pop %v1269
    %v1398 = vtanh.pop %v1270
    %v1399 = vtanh.pop %v1271
    %v1400 = vtanh.pop %v1272
    %v1401 = vtanh.pop %v1273
    %v1402 = vtanh.pop %v1274
    %v1403 = vtanh.pop %v1275
    %v1404 = vtanh.pop %v1276
    %v1405 = vtanh.pop %v1277
    %v1406 = vtanh.pop %v1278
    %v1407 = vtanh.pop %v1279
    %v1408 = vtanh.pop %v1280
    %v1409 = vtanh.pop %v1281
    %v1410 = vtanh.pop %v1282
    %v1411 = vtanh.pop %v1283
    %v1412 = vtanh.pop %v1284
    %v1413 = vtanh.pop %v1285
    %v1414 = vtanh.pop %v1286
    %v1415 = vtanh.pop %v1287
    %v1416 = vtanh.pop %v1288
    %v1417 = vtanh.pop %v1289
    %v1418 = vtanh.pop %v1290
    %v1419 = vtanh.pop %v1291
    %v1420 = vtanh.pop %v1292
    %v1421 = vtanh.pop %v1293
    %v1422 = vtanh.pop %v1294
    %v1423 = vtanh.pop %v1295
    %v1424 = vtanh.pop %v1296
    %v1425 = vtanh.pop %v1297
    %v1426 = vtanh.pop %v1298
    %v1427 = vtanh.pop %v1299
    %v1428 = vtanh.pop %v1300
    %v1429 = vtanh.pop %v1301
    %v1430 = vtanh.pop %v1302
    %v1431 = vtanh.pop %v1303
    %v1432 = vtanh.pop %v1304
    %v1433 = vtanh.pop %v1305
    %v1434 = vtanh.pop %v1306
    %v1435 = vtanh.pop %v1307
    %v1436 = vtanh.pop %v1308
    %v1437 = vtanh.pop %v1309
    %v1438 = vtanh.pop %v1310
    %v1439 = vtanh.pop %v1311
    %v1440 = vtanh.pop %v1312
    %v1441 = vtanh.pop %v1313
    %v1442 = vtanh.pop %v1314
    %v1443 = vtanh.pop %v1315
    %v1444 = vtanh.pop %v1316
    %v1445 = vtanh.pop %v1317
    %v1446 = vtanh.pop %v1318
    %v1447 = vtanh.pop %v1319
    %v1448 = vtanh.pop %v1320
    %v1449 = vtanh.pop %v1321
    %v1450 = vtanh.pop %v1322
    %v1451 = vtanh.pop %v1323
    %v1452 = vtanh.pop %v1324
    %v1453 = vtanh.pop %v1325
    %v1454 = vtanh.pop %v1326
    %v1455 = vtanh.pop %v1327
    %v1456 = vtanh.pop %v1328
    %v1457 = vtanh.pop %v1329
    %v1458 = vtanh.pop %v1330
    %v1459 = vtanh.pop %v1331
    %v1460 = vtanh.pop %v1332
    %v1461 = vtanh.pop %v1333
    %v1462 = vtanh.pop %v1334
    %v1463 = vtanh.pop %v1335
    %v1464 = vtanh.pop %v1336
    %v1465 = vtanh.pop %v1337
    %v1466 = vtanh.pop %v1338
    %v1467 = vtanh.pop %v1339
    %v1468 = vtanh.pop %v1340
    %v1469 = vtanh.pop %v1341
    %v1470 = vtanh.pop %v1342
    %v1471 = vtanh.pop %v1343
    %v1472 = vtanh.pop %v1344
    %v1473 = vtanh.pop %v1345
    %v1474 = vtanh.pop %v1346
    %v1475 = vtanh.pop %v1347
    %v1476 = vtanh.pop %v1348
    %v1477 = vtanh.pop %v1349
    %v1478 = vtanh.pop %v1350
    %v1479 = vtanh.pop %v1351
    %v1480 = vtanh.pop %v1352
    %v1481 = vtanh.pop %v1353
    %v1482 = vtanh.pop %v1354
    %v1483 = vtanh.pop %v1355
    %v1484 = vtanh.pop %v1356
    %v1485 = vtanh.pop %v1357
    %v1486 = vtanh.pop %v1358
    %v1487 = vtanh.pop %v1359
    %v1488 = vtanh.pop %v1360
    %v1489 = vtanh.pop %v1361
    %v1490 = vtanh.pop %v1362
    %v1491 = vtanh.pop %v1363
    %v1492 = vtanh.pop %v1364
    %v1493 = vtanh.pop %v1365
    %v1494 = vtanh.pop %v1366
    %v1495 = vtanh.pop %v1367
    %v1496 = vtanh.pop %v1368
    %v1497 = vtanh.pop %v1369
    %v1498 = vtanh.pop %v1370
    %v1499 = vtanh.pop %v1371
    %v1500 = vtanh.pop %v1372
    %v1501 = vtanh.pop %v1373
    %v1502 = vtanh.pop %v1374
    %v1503 = vtanh.pop %v1375
    %v1504 = vtanh.pop %v1376
    %v1505 = vtanh.pop %v1377
    %v1506 = vtanh.pop %v1378
    %v1507 = vtanh.pop %v1379
    %v1508 = vtanh.pop %v1380
    %v1509 = vtanh.pop %v1381
    %v1510 = vtanh.pop %v1382
    %v1511 = vtanh.pop %v1383
    %v1512 = vtanh.pop %v1384
    %v1513 = vtanh.pop %v1385
    %v1514 = vtanh.pop %v1386
    %v1515 = vtanh.pop %v1387
    %v1516 = vadd.f32 %v1388, 1.0
    %v1517 = vadd.f32 %v1389, 1.0
    %v1518 = vadd.f32 %v1390, 1.0
    %v1519 = vadd.f32 %v1391, 1.0
    %v1520 = vadd.f32 %v1392, 1.0
    %v1521 = vadd.f32 %v1393, 1.0
    %v1522 = vadd.f32 %v1394, 1.0
    %v1523 = vadd.f32 %v1395, 1.0
    %v1524 = vadd.f32 %v1396, 1.0
    %v1525 = vadd.f32 %v1397, 1.0
    %v1526 = vadd.f32 %v1398, 1.0
    %v1527 = vadd.f32 %v1399, 1.0
    %v1528 = vadd.f32 %v1400, 1.0
    %v1529 = vadd.f32 %v1401, 1.0
    %v1530 = vadd.f32 %v1402, 1.0
    %v1531 = vadd.f32 %v1403, 1.0
    %v1532 = vadd.f32 %v1404, 1.0
    %v1533 = vadd.f32 %v1405, 1.0
    %v1534 = vadd.f32 %v1406, 1.0
    %v1535 = vadd.f32 %v1407, 1.0
    %v1536 = vadd.f32 %v1408, 1.0
    %v1537 = vadd.f32 %v1409, 1.0
    %v1538 = vadd.f32 %v1410, 1.0
    %v1539 = vadd.f32 %v1411, 1.0
    %v1540 = vadd.f32 %v1412, 1.0
    %v1541 = vadd.f32 %v1413, 1.0
    %v1542 = vadd.f32 %v1414, 1.0
    %v1543 = vadd.f32 %v1415, 1.0
    %v1544 = vadd.f32 %v1416, 1.0
    %v1545 = vadd.f32 %v1417, 1.0
    %v1546 = vadd.f32 %v1418, 1.0
    %v1547 = vadd.f32 %v1419, 1.0
    %v1548 = vadd.f32 %v1420, 1.0
    %v1549 = vadd.f32 %v1421, 1.0
    %v1550 = vadd.f32 %v1422, 1.0
    %v1551 = vadd.f32 %v1423, 1.0
    %v1552 = vadd.f32 %v1424, 1.0
    %v1553 = vadd.f32 %v1425, 1.0
    %v1554 = vadd.f32 %v1426, 1.0
    %v1555 = vadd.f32 %v1427, 1.0
    %v1556 = vadd.f32 %v1428, 1.0
    %v1557 = vadd.f32 %v1429, 1.0
    %v1558 = vadd.f32 %v1430, 1.0
    %v1559 = vadd.f32 %v1431, 1.0
    %v1560 = vadd.f32 %v1432, 1.0
    %v1561 = vadd.f32 %v1433, 1.0
    %v1562 = vadd.f32 %v1434, 1.0
    %v1563 = vadd.f32 %v1435, 1.0
    %v1564 = vadd.f32 %v1436, 1.0
    %v1565 = vadd.f32 %v1437, 1.0
    %v1566 = vadd.f32 %v1438, 1.0
    %v1567 = vadd.f32 %v1439, 1.0
    %v1568 = vadd.f32 %v1440, 1.0
    %v1569 = vadd.f32 %v1441, 1.0
    %v1570 = vadd.f32 %v1442, 1.0
    %v1571 = vadd.f32 %v1443, 1.0
    %v1572 = vadd.f32 %v1444, 1.0
    %v1573 = vadd.f32 %v1445, 1.0
    %v1574 = vadd.f32 %v1446, 1.0
    %v1575 = vadd.f32 %v1447, 1.0
    %v1576 = vadd.f32 %v1448, 1.0
    %v1577 = vadd.f32 %v1449, 1.0
    %v1578 = vadd.f32 %v1450, 1.0
    %v1579 = vadd.f32 %v1451, 1.0
    %v1580 = vadd.f32 %v1452, 1.0
    %v1581 = vadd.f32 %v1453, 1.0
    %v1582 = vadd.f32 %v1454, 1.0
    %v1583 = vadd.f32 %v1455, 1.0
    %v1584 = vadd.f32 %v1456, 1.0
    %v1585 = vadd.f32 %v1457, 1.0
    %v1586 = vadd.f32 %v1458, 1.0
    %v1587 = vadd.f32 %v1459, 1.0
    %v1588 = vadd.f32 %v1460, 1.0
    %v1589 = vadd.f32 %v1461, 1.0
    %v1590 = vadd.f32 %v1462, 1.0
    %v1591 = vadd.f32 %v1463, 1.0
    %v1592 = vadd.f32 %v1464, 1.0
    %v1593 = vadd.f32 %v1465, 1.0
    %v1594 = vadd.f32 %v1466, 1.0
    %v1595 = vadd.f32 %v1467, 1.0
    %v1596 = vadd.f32 %v1468, 1.0
    %v1597 = vadd.f32 %v1469, 1.0
    %v1598 = vadd.f32 %v1470, 1.0
    %v1599 = vadd.f32 %v1471, 1.0
    %v1600 = vadd.f32 %v1472, 1.0
    %v1601 = vadd.f32 %v1473, 1.0
    %v1602 = vadd.f32 %v1474, 1.0
    %v1603 = vadd.f32 %v1475, 1.0
    %v1604 = vadd.f32 %v1476, 1.0
    %v1605 = vadd.f32 %v1477, 1.0
    %v1606 = vadd.f32 %v1478, 1.0
    %v1607 = vadd.f32 %v1479, 1.0
    %v1608 = vadd.f32 %v1480, 1.0
    %v1609 = vadd.f32 %v1481, 1.0
    %v1610 = vadd.f32 %v1482, 1.0
    %v1611 = vadd.f32 %v1483, 1.0
    %v1612 = vadd.f32 %v1484, 1.0
    %v1613 = vadd.f32 %v1485, 1.0
    %v1614 = vadd.f32 %v1486, 1.0
    %v1615 = vadd.f32 %v1487, 1.0
    %v1616 = vadd.f32 %v1488, 1.0
    %v1617 = vadd.f32 %v1489, 1.0
    %v1618 = vadd.f32 %v1490, 1.0
    %v1619 = vadd.f32 %v1491, 1.0
    %v1620 = vadd.f32 %v1492, 1.0
    %v1621 = vadd.f32 %v1493, 1.0
    %v1622 = vadd.f32 %v1494, 1.0
    %v1623 = vadd.f32 %v1495, 1.0
    %v1624 = vadd.f32 %v1496, 1.0
    %v1625 = vadd.f32 %v1497, 1.0
    %v1626 = vadd.f32 %v1498, 1.0
    %v1627 = vadd.f32 %v1499, 1.0
    %v1628 = vadd.f32 %v1500, 1.0
    %v1629 = vadd.f32 %v1501, 1.0
    %v1630 = vadd.f32 %v1502, 1.0
    %v1631 = vadd.f32 %v1503, 1.0
    %v1632 = vadd.f32 %v1504, 1.0
    %v1633 = vadd.f32 %v1505, 1.0
    %v1634 = vadd.f32 %v1506, 1.0
    %v1635 = vadd.f32 %v1507, 1.0
    %v1636 = vadd.f32 %v1508, 1.0
    %v1637 = vadd.f32 %v1509, 1.0
    %v1638 = vadd.f32 %v1510, 1.0
    %v1639 = vadd.f32 %v1511, 1.0
    %v1640 = vadd.f32 %v1512, 1.0
    %v1641 = vadd.f32 %v1513, 1.0
    %v1642 = vadd.f32 %v1514, 1.0
    %v1643 = vadd.f32 %v1515, 1.0
    %v1644 = vmul.f32 %v620, %v1516
    %v1645 = vmul.f32 %v621, %v1517
    %v1646 = vmul.f32 %v622, %v1518
    %v1647 = vmul.f32 %v623, %v1519
    %v1648 = vmul.f32 %v624, %v1520
    %v1649 = vmul.f32 %v625, %v1521
    %v1650 = vmul.f32 %v626, %v1522
    %v1651 = vmul.f32 %v627, %v1523
    %v1652 = vmul.f32 %v628, %v1524
    %v1653 = vmul.f32 %v629, %v1525
    %v1654 = vmul.f32 %v630, %v1526
    %v1655 = vmul.f32 %v631, %v1527
    %v1656 = vmul.f32 %v632, %v1528
    %v1657 = vmul.f32 %v633, %v1529
    %v1658 = vmul.f32 %v634, %v1530
    %v1659 = vmul.f32 %v635, %v1531
    %v1660 = vmul.f32 %v636, %v1532
    %v1661 = vmul.f32 %v637, %v1533
    %v1662 = vmul.f32 %v638, %v1534
    %v1663 = vmul.f32 %v639, %v1535
    %v1664 = vmul.f32 %v640, %v1536
    %v1665 = vmul.f32 %v641, %v1537
    %v1666 = vmul.f32 %v642, %v1538
    %v1667 = vmul.f32 %v643, %v1539
    %v1668 = vmul.f32 %v644, %v1540
    %v1669 = vmul.f32 %v645, %v1541
    %v1670 = vmul.f32 %v646, %v1542
    %v1671 = vmul.f32 %v647, %v1543
    %v1672 = vmul.f32 %v648, %v1544
    %v1673 = vmul.f32 %v649, %v1545
    %v1674 = vmul.f32 %v650, %v1546
    %v1675 = vmul.f32 %v651, %v1547
    %v1676 = vmul.f32 %v652, %v1548
    %v1677 = vmul.f32 %v653, %v1549
    %v1678 = vmul.f32 %v654, %v1550
    %v1679 = vmul.f32 %v655, %v1551
    %v1680 = vmul.f32 %v656, %v1552
    %v1681 = vmul.f32 %v657, %v1553
    %v1682 = vmul.f32 %v658, %v1554
    %v1683 = vmul.f32 %v659, %v1555
    %v1684 = vmul.f32 %v660, %v1556
    %v1685 = vmul.f32 %v661, %v1557
    %v1686 = vmul.f32 %v662, %v1558
    %v1687 = vmul.f32 %v663, %v1559
    %v1688 = vmul.f32 %v664, %v1560
    %v1689 = vmul.f32 %v665, %v1561
    %v1690 = vmul.f32 %v666, %v1562
    %v1691 = vmul.f32 %v667, %v1563
    %v1692 = vmul.f32 %v668, %v1564
    %v1693 = vmul.f32 %v669, %v1565
    %v1694 = vmul.f32 %v670, %v1566
    %v1695 = vmul.f32 %v671, %v1567
    %v1696 = vmul.f32 %v672, %v1568
    %v1697 = vmul.f32 %v673, %v1569
    %v1698 = vmul.f32 %v674, %v1570
    %v1699 = vmul.f32 %v675, %v1571
    %v1700 = vmul.f32 %v676, %v1572
    %v1701 = vmul.f32 %v677, %v1573
    %v1702 = vmul.f32 %v678, %v1574
    %v1703 = vmul.f32 %v679, %v1575
    %v1704 = vmul.f32 %v680, %v1576
    %v1705 = vmul.f32 %v681, %v1577
    %v1706 = vmul.f32 %v682, %v1578
    %v1707 = vmul.f32 %v683, %v1579
    %v1708 = vmul.f32 %v684, %v1580
    %v1709 = vmul.f32 %v685, %v1581
    %v1710 = vmul.f32 %v686, %v1582
    %v1711 = vmul.f32 %v687, %v1583
    %v1712 = vmul.f32 %v688, %v1584
    %v1713 = vmul.f32 %v689, %v1585
    %v1714 = vmul.f32 %v690, %v1586
    %v1715 = vmul.f32 %v691, %v1587
    %v1716 = vmul.f32 %v692, %v1588
    %v1717 = vmul.f32 %v693, %v1589
    %v1718 = vmul.f32 %v694, %v1590
    %v1719 = vmul.f32 %v695, %v1591
    %v1720 = vmul.f32 %v696, %v1592
    %v1721 = vmul.f32 %v697, %v1593
    %v1722 = vmul.f32 %v698, %v1594
    %v1723 = vmul.f32 %v699, %v1595
    %v1724 = vmul.f32 %v700, %v1596
    %v1725 = vmul.f32 %v701, %v1597
    %v1726 = vmul.f32 %v702, %v1598
    %v1727 = vmul.f32 %v703, %v1599
    %v1728 = vmul.f32 %v704, %v1600
    %v1729 = vmul.f32 %v705, %v1601
    %v1730 = vmul.f32 %v706, %v1602
    %v1731 = vmul.f32 %v707, %v1603
    %v1732 = vmul.f32 %v708, %v1604
    %v1733 = vmul.f32 %v709, %v1605
    %v1734 = vmul.f32 %v710, %v1606
    %v1735 = vmul.f32 %v711, %v1607
    %v1736 = vmul.f32 %v712, %v1608
    %v1737 = vmul.f32 %v713, %v1609
    %v1738 = vmul.f32 %v714, %v1610
    %v1739 = vmul.f32 %v715, %v1611
    %v1740 = vmul.f32 %v716, %v1612
    %v1741 = vmul.f32 %v717, %v1613
    %v1742 = vmul.f32 %v718, %v1614
    %v1743 = vmul.f32 %v719, %v1615
    %v1744 = vmul.f32 %v720, %v1616
    %v1745 = vmul.f32 %v721, %v1617
    %v1746 = vmul.f32 %v722, %v1618
    %v1747 = vmul.f32 %v723, %v1619
    %v1748 = vmul.f32 %v724, %v1620
    %v1749 = vmul.f32 %v725, %v1621
    %v1750 = vmul.f32 %v726, %v1622
    %v1751 = vmul.f32 %v727, %v1623
    %v1752 = vmul.f32 %v728, %v1624
    %v1753 = vmul.f32 %v729, %v1625
    %v1754 = vmul.f32 %v730, %v1626
    %v1755 = vmul.f32 %v731, %v1627
    %v1756 = vmul.f32 %v732, %v1628
    %v1757 = vmul.f32 %v733, %v1629
    %v1758 = vmul.f32 %v734, %v1630
    %v1759 = vmul.f32 %v735, %v1631
    %v1760 = vmul.f32 %v736, %v1632
    %v1761 = vmul.f32 %v737, %v1633
    %v1762 = vmul.f32 %v738, %v1634
    %v1763 = vmul.f32 %v739, %v1635
    %v1764 = vmul.f32 %v740, %v1636
    %v1765 = vmul.f32 %v741, %v1637
    %v1766 = vmul.f32 %v742, %v1638
    %v1767 = vmul.f32 %v743, %v1639
    %v1768 = vmul.f32 %v744, %v1640
    %v1769 = vmul.f32 %v745, %v1641
    %v1770 = vmul.f32 %v746, %v1642
    %v1771 = vmul.f32 %v747, %v1643
    %v1772 = vpack.c.bf16 %v1646, %v1644
    %v1773 = vpack.c.bf16 %v1647, %v1645
    %v1774 = vpack.c.bf16 %v1650, %v1648
    %v1775 = vpack.c.bf16 %v1651, %v1649
    %v1776 = vpack.c.bf16 %v1654, %v1652
    %v1777 = vpack.c.bf16 %v1655, %v1653
    %v1778 = vpack.c.bf16 %v1658, %v1656
    %v1779 = vpack.c.bf16 %v1659, %v1657
    %v1780 = vpack.c.bf16 %v1662, %v1660
    %v1781 = vpack.c.bf16 %v1663, %v1661
    %v1782 = vpack.c.bf16 %v1666, %v1664
    %v1783 = vpack.c.bf16 %v1667, %v1665
    %v1784 = vpack.c.bf16 %v1670, %v1668
    %v1785 = vpack.c.bf16 %v1671, %v1669
    %v1786 = vpack.c.bf16 %v1674, %v1672
    %v1787 = vpack.c.bf16 %v1675, %v1673
    %v1788 = vpack.c.bf16 %v1678, %v1676
    %v1789 = vpack.c.bf16 %v1679, %v1677
    %v1790 = vpack.c.bf16 %v1682, %v1680
    %v1791 = vpack.c.bf16 %v1683, %v1681
    %v1792 = vpack.c.bf16 %v1686, %v1684
    %v1793 = vpack.c.bf16 %v1687, %v1685
    %v1794 = vpack.c.bf16 %v1690, %v1688
    %v1795 = vpack.c.bf16 %v1691, %v1689
    %v1796 = vpack.c.bf16 %v1694, %v1692
    %v1797 = vpack.c.bf16 %v1695, %v1693
    %v1798 = vpack.c.bf16 %v1698, %v1696
    %v1799 = vpack.c.bf16 %v1699, %v1697
    %v1800 = vpack.c.bf16 %v1702, %v1700
    %v1801 = vpack.c.bf16 %v1703, %v1701
    %v1802 = vpack.c.bf16 %v1706, %v1704
    %v1803 = vpack.c.bf16 %v1707, %v1705
    %v1804 = vpack.c.bf16 %v1710, %v1708
    %v1805 = vpack.c.bf16 %v1711, %v1709
    %v1806 = vpack.c.bf16 %v1714, %v1712
    %v1807 = vpack.c.bf16 %v1715, %v1713
    %v1808 = vpack.c.bf16 %v1718, %v1716
    %v1809 = vpack.c.bf16 %v1719, %v1717
    %v1810 = vpack.c.bf16 %v1722, %v1720
    %v1811 = vpack.c.bf16 %v1723, %v1721
    %v1812 = vpack.c.bf16 %v1726, %v1724
    %v1813 = vpack.c.bf16 %v1727, %v1725
    %v1814 = vpack.c.bf16 %v1730, %v1728
    %v1815 = vpack.c.bf16 %v1731, %v1729
    %v1816 = vpack.c.bf16 %v1734, %v1732
    %v1817 = vpack.c.bf16 %v1735, %v1733
    %v1818 = vpack.c.bf16 %v1738, %v1736
    %v1819 = vpack.c.bf16 %v1739, %v1737
    %v1820 = vpack.c.bf16 %v1742, %v1740
    %v1821 = vpack.c.bf16 %v1743, %v1741
    %v1822 = vpack.c.bf16 %v1746, %v1744
    %v1823 = vpack.c.bf16 %v1747, %v1745
    %v1824 = vpack.c.bf16 %v1750, %v1748
    %v1825 = vpack.c.bf16 %v1751, %v1749
    %v1826 = vpack.c.bf16 %v1754, %v1752
    %v1827 = vpack.c.bf16 %v1755, %v1753
    %v1828 = vpack.c.bf16 %v1758, %v1756
    %v1829 = vpack.c.bf16 %v1759, %v1757
    %v1830 = vpack.c.bf16 %v1762, %v1760
    %v1831 = vpack.c.bf16 %v1763, %v1761
    %v1832 = vpack.c.bf16 %v1766, %v1764
    %v1833 = vpack.c.bf16 %v1767, %v1765
    %v1834 = vpack.c.bf16 %v1770, %v1768
    %v1835 = vpack.c.bf16 %v1771, %v1769
    %v1836 = vld [vmem:[#allocation7] sm:$0xf]
    %v1837 = vld [vmem:[#allocation7 + $0x4] sm:$0xf]
    %v1838 = vld [vmem:[#allocation7 + $0x8] sm:$0xf]
    %v1839 = vld [vmem:[#allocation7 + $0xc] sm:$0xf]
    %v1840 = vld [vmem:[#allocation7 + $0x10] sm:$0xf]
    %v1841 = vld [vmem:[#allocation7 + $0x14] sm:$0xf]
    %v1842 = vld [vmem:[#allocation7 + $0x18] sm:$0xf]
    %v1843 = vld [vmem:[#allocation7 + $0x1c] sm:$0xf]
    %v1844 = vld [vmem:[#allocation7 + $0x20] sm:$0xf]
    %v1845 = vld [vmem:[#allocation7 + $0x24] sm:$0xf]
    %v1846 = vld [vmem:[#allocation7 + $0x28] sm:$0xf]
    %v1847 = vld [vmem:[#allocation7 + $0x2c] sm:$0xf]
    %v1848 = vld [vmem:[#allocation7 + $0x30] sm:$0xf]
    %v1849 = vld [vmem:[#allocation7 + $0x34] sm:$0xf]
    %v1850 = vld [vmem:[#allocation7 + $0x38] sm:$0xf]
    %v1851 = vld [vmem:[#allocation7 + $0x3c] sm:$0xf]
    %v1852 = vld [vmem:[#allocation7 + $0x40] sm:$0xf]
    %v1853 = vld [vmem:[#allocation7 + $0x44] sm:$0xf]
    %v1854 = vld [vmem:[#allocation7 + $0x48] sm:$0xf]
    %v1855 = vld [vmem:[#allocation7 + $0x4c] sm:$0xf]
    %v1856 = vld [vmem:[#allocation7 + $0x50] sm:$0xf]
    %v1857 = vld [vmem:[#allocation7 + $0x54] sm:$0xf]
    %v1858 = vld [vmem:[#allocation7 + $0x58] sm:$0xf]
    %v1859 = vld [vmem:[#allocation7 + $0x5c] sm:$0xf]
    %v1860 = vld [vmem:[#allocation7 + $0x60] sm:$0xf]
    %v1861 = vld [vmem:[#allocation7 + $0x64] sm:$0xf]
    %v1862 = vld [vmem:[#allocation7 + $0x68] sm:$0xf]
    %v1863 = vld [vmem:[#allocation7 + $0x6c] sm:$0xf]
    %v1864 = vld [vmem:[#allocation7 + $0x70] sm:$0xf]
    %v1865 = vld [vmem:[#allocation7 + $0x74] sm:$0xf]
    %v1866 = vld [vmem:[#allocation7 + $0x78] sm:$0xf]
    %v1867 = vld [vmem:[#allocation7 + $0x7c] sm:$0xf]
    %v1868 = vld [vmem:[%s4] sm:$0x1]
    %v1870 = vlaneseq
    %v1871 = vshrl.u32 %v1870, 7
    %v1872 = vsub.s32 0, %v1871
    %v1873 = vrot.slane %v1868, %v1872
    %v1907 = vunpack.c.l.b16 %v1836
    %v1908 = vunpack.c.l.b16 %v1837
    %v1909 = vunpack.c.l.b16 %v1838
    %v1910 = vunpack.c.l.b16 %v1839
    %v1911 = vunpack.c.l.b16 %v1840
    %v1912 = vunpack.c.l.b16 %v1841
    %v1913 = vunpack.c.l.b16 %v1842
    %v1914 = vunpack.c.l.b16 %v1843
    %v1915 = vunpack.c.l.b16 %v1844
    %v1916 = vunpack.c.l.b16 %v1845
    %v1917 = vunpack.c.l.b16 %v1846
    %v1918 = vunpack.c.l.b16 %v1847
    %v1919 = vunpack.c.l.b16 %v1848
    %v1920 = vunpack.c.l.b16 %v1849
    %v1921 = vunpack.c.l.b16 %v1850
    %v1922 = vunpack.c.l.b16 %v1851
    %v1923 = vunpack.c.l.b16 %v1852
    %v1924 = vunpack.c.l.b16 %v1853
    %v1925 = vunpack.c.l.b16 %v1854
    %v1926 = vunpack.c.l.b16 %v1855
    %v1927 = vunpack.c.l.b16 %v1856
    %v1928 = vunpack.c.l.b16 %v1857
    %v1929 = vunpack.c.l.b16 %v1858
    %v1930 = vunpack.c.l.b16 %v1859
    %v1931 = vunpack.c.l.b16 %v1860
    %v1932 = vunpack.c.l.b16 %v1861
    %v1933 = vunpack.c.l.b16 %v1862
    %v1934 = vunpack.c.l.b16 %v1863
    %v1935 = vunpack.c.l.b16 %v1864
    %v1936 = vunpack.c.l.b16 %v1865
    %v1937 = vunpack.c.l.b16 %v1866
    %v1938 = vunpack.c.l.b16 %v1867
    %v1939 = vpack.c.b16 %v1908, %v1907
    %v1940 = vpack.c.b16 %v1910, %v1909
    %v1941 = vpack.c.b16 %v1912, %v1911
    %v1942 = vpack.c.b16 %v1914, %v1913
    %v1943 = vpack.c.b16 %v1916, %v1915
    %v1944 = vpack.c.b16 %v1918, %v1917
    %v1945 = vpack.c.b16 %v1920, %v1919
    %v1946 = vpack.c.b16 %v1922, %v1921
    %v1947 = vpack.c.b16 %v1924, %v1923
    %v1948 = vpack.c.b16 %v1926, %v1925
    %v1949 = vpack.c.b16 %v1928, %v1927
    %v1950 = vpack.c.b16 %v1930, %v1929
    %v1951 = vpack.c.b16 %v1932, %v1931
    %v1952 = vpack.c.b16 %v1934, %v1933
    %v1953 = vpack.c.b16 %v1936, %v1935
    %v1954 = vpack.c.b16 %v1938, %v1937
    %1971 = vmatprep.subr.bf16.mxu0 0
    %1972 = vmatpush1.bf16.msra.mxu0 %v1946
    %1973 = vmatprep.subr.bf16.mxu0 0
    %1974 = vmatpush1.bf16.msra.mxu0 %v1945
    %1975 = vmatprep.subr.bf16.mxu0 0
    %1976 = vmatpush1.bf16.msra.mxu0 %v1944
    %1977 = vmatprep.subr.bf16.mxu0 0
    %1978 = vmatpush1.bf16.msra.mxu0 %v1943
    %1979 = vmatprep.subr.bf16.mxu0 0
    %1980 = vmatpush1.bf16.msra.mxu0 %v1942
    %1981 = vmatprep.subr.bf16.mxu0 0
    %1982 = vmatpush1.bf16.msra.mxu0 %v1941
    %1983 = vmatprep.subr.bf16.mxu0 0
    %1984 = vmatpush1.bf16.msra.mxu0 %v1940
    %1985 = vmatprep.subr.bf16.mxu0 0
    %1986 = vmatpush1.bf16.msra.mxu0 %v1939
    %1987 = vmatprep.subr.bf16.mxu0 0
    %1988 = vmatpush2.bf16.msra.mxu0 %v1954
    %1989 = vmatprep.subr.bf16.mxu0 0
    %1990 = vmatpush2.bf16.msra.mxu0 %v1953
    %1991 = vmatprep.subr.bf16.mxu0 0
    %1992 = vmatpush2.bf16.msra.mxu0 %v1952
    %1993 = vmatprep.subr.bf16.mxu0 0
    %1994 = vmatpush2.bf16.msra.mxu0 %v1951
    %1995 = vmatprep.subr.bf16.mxu0 0
    %1996 = vmatpush2.bf16.msra.mxu0 %v1950
    %1997 = vmatprep.subr.bf16.mxu0 0
    %1998 = vmatpush2.bf16.msra.mxu0 %v1949
    %1999 = vmatprep.subr.bf16.mxu0 0
    %2000 = vmatpush2.bf16.msra.mxu0 %v1948
    %2001 = vmatprep.subr.bf16.mxu0 0
    %2002 = vmatpush2.bf16.msra.mxu0 %v1947
    %2003 = vmatprep.mubr.bf16.mxu0 %v1773
    %2004 = vmatmul.mubr.bf16.gmra.mxu0 %v1772
    %v2005 = vpop.f32.mrf.mxu0
    %v2006 = vadd.f32 %v1873, %v2005
    %v2007 = vpop.f32.mrf.mxu0
    %v2008 = vpop.f32.mrf.mxu0
    %v2009 = vadd.f32 %v1873, %v2008
    %v2010 = vpop.f32.mrf.mxu0
    %2011 = vmatprep.mubr.bf16.mxu0 %v1775
    %2012 = vmatmul.mubr.bf16.gmra.mxu0 %v1774
    %v2013 = vpop.f32.mrf.mxu0
    %v2014 = vadd.f32 %v1873, %v2013
    %v2015 = vpop.f32.mrf.mxu0
    %v2016 = vpop.f32.mrf.mxu0
    %v2017 = vadd.f32 %v1873, %v2016
    %v2018 = vpop.f32.mrf.mxu0
    %2019 = vmatprep.mubr.bf16.mxu0 %v1777
    %2020 = vmatmul.mubr.bf16.gmra.mxu0 %v1776
    %v2021 = vpop.f32.mrf.mxu0
    %v2022 = vadd.f32 %v1873, %v2021
    %v2023 = vpop.f32.mrf.mxu0
    %v2024 = vpop.f32.mrf.mxu0
    %v2025 = vadd.f32 %v1873, %v2024
    %v2026 = vpop.f32.mrf.mxu0
    %2027 = vmatprep.mubr.bf16.mxu0 %v1779
    %2028 = vmatmul.mubr.bf16.gmra.mxu0 %v1778
    %v2029 = vpop.f32.mrf.mxu0
    %v2030 = vadd.f32 %v1873, %v2029
    %v2031 = vpop.f32.mrf.mxu0
    %v2032 = vpop.f32.mrf.mxu0
    %v2033 = vadd.f32 %v1873, %v2032
    %v2034 = vpop.f32.mrf.mxu0
    %2035 = vmatprep.mubr.bf16.mxu0 %v1781
    %2036 = vmatmul.mubr.bf16.gmra.mxu0 %v1780
    %v2037 = vpop.f32.mrf.mxu0
    %v2038 = vadd.f32 %v1873, %v2037
    %v2039 = vpop.f32.mrf.mxu0
    %v2040 = vpop.f32.mrf.mxu0
    %v2041 = vadd.f32 %v1873, %v2040
    %v2042 = vpop.f32.mrf.mxu0
    %2043 = vmatprep.mubr.bf16.mxu0 %v1783
    %2044 = vmatmul.mubr.bf16.gmra.mxu0 %v1782
    %v2045 = vpop.f32.mrf.mxu0
    %v2046 = vadd.f32 %v1873, %v2045
    %v2047 = vpop.f32.mrf.mxu0
    %v2048 = vpop.f32.mrf.mxu0
    %v2049 = vadd.f32 %v1873, %v2048
    %v2050 = vpop.f32.mrf.mxu0
    %2051 = vmatprep.mubr.bf16.mxu0 %v1785
    %2052 = vmatmul.mubr.bf16.gmra.mxu0 %v1784
    %v2053 = vpop.f32.mrf.mxu0
    %v2054 = vadd.f32 %v1873, %v2053
    %v2055 = vpop.f32.mrf.mxu0
    %v2056 = vpop.f32.mrf.mxu0
    %v2057 = vadd.f32 %v1873, %v2056
    %v2058 = vpop.f32.mrf.mxu0
    %2059 = vmatprep.mubr.bf16.mxu0 %v1787
    %2060 = vmatmul.mubr.bf16.gmra.mxu0 %v1786
    %v2061 = vpop.f32.mrf.mxu0
    %v2062 = vadd.f32 %v1873, %v2061
    %v2063 = vpop.f32.mrf.mxu0
    %v2064 = vpop.f32.mrf.mxu0
    %v2065 = vadd.f32 %v1873, %v2064
    %v2066 = vpop.f32.mrf.mxu0
    %2067 = vmatprep.mubr.bf16.mxu0 %v1789
    %2068 = vmatmul.mubr.bf16.gmra.mxu0 %v1788
    %v2069 = vpop.f32.mrf.mxu0
    %v2070 = vadd.f32 %v1873, %v2069
    %v2071 = vpop.f32.mrf.mxu0
    %v2072 = vpop.f32.mrf.mxu0
    %v2073 = vadd.f32 %v1873, %v2072
    %v2074 = vpop.f32.mrf.mxu0
    %2075 = vmatprep.mubr.bf16.mxu0 %v1791
    %2076 = vmatmul.mubr.bf16.gmra.mxu0 %v1790
    %v2077 = vpop.f32.mrf.mxu0
    %v2078 = vadd.f32 %v1873, %v2077
    %v2079 = vpop.f32.mrf.mxu0
    %v2080 = vpop.f32.mrf.mxu0
    %v2081 = vadd.f32 %v1873, %v2080
    %v2082 = vpop.f32.mrf.mxu0
    %2083 = vmatprep.mubr.bf16.mxu0 %v1793
    %2084 = vmatmul.mubr.bf16.gmra.mxu0 %v1792
    %v2085 = vpop.f32.mrf.mxu0
    %v2086 = vadd.f32 %v1873, %v2085
    %v2087 = vpop.f32.mrf.mxu0
    %v2088 = vpop.f32.mrf.mxu0
    %v2089 = vadd.f32 %v1873, %v2088
    %v2090 = vpop.f32.mrf.mxu0
    %2091 = vmatprep.mubr.bf16.mxu0 %v1795
    %2092 = vmatmul.mubr.bf16.gmra.mxu0 %v1794
    %v2093 = vpop.f32.mrf.mxu0
    %v2094 = vadd.f32 %v1873, %v2093
    %v2095 = vpop.f32.mrf.mxu0
    %v2096 = vpop.f32.mrf.mxu0
    %v2097 = vadd.f32 %v1873, %v2096
    %v2098 = vpop.f32.mrf.mxu0
    %2099 = vmatprep.mubr.bf16.mxu0 %v1797
    %2100 = vmatmul.mubr.bf16.gmra.mxu0 %v1796
    %v2101 = vpop.f32.mrf.mxu0
    %v2102 = vadd.f32 %v1873, %v2101
    %v2103 = vpop.f32.mrf.mxu0
    %v2104 = vpop.f32.mrf.mxu0
    %v2105 = vadd.f32 %v1873, %v2104
    %v2106 = vpop.f32.mrf.mxu0
    %2107 = vmatprep.mubr.bf16.mxu0 %v1799
    %2108 = vmatmul.mubr.bf16.gmra.mxu0 %v1798
    %v2109 = vpop.f32.mrf.mxu0
    %v2110 = vadd.f32 %v1873, %v2109
    %v2111 = vpop.f32.mrf.mxu0
    %v2112 = vpop.f32.mrf.mxu0
    %v2113 = vadd.f32 %v1873, %v2112
    %v2114 = vpop.f32.mrf.mxu0
    %2115 = vmatprep.mubr.bf16.mxu0 %v1801
    %2116 = vmatmul.mubr.bf16.gmra.mxu0 %v1800
    %v2117 = vpop.f32.mrf.mxu0
    %v2118 = vadd.f32 %v1873, %v2117
    %v2119 = vpop.f32.mrf.mxu0
    %v2120 = vpop.f32.mrf.mxu0
    %v2121 = vadd.f32 %v1873, %v2120
    %v2122 = vpop.f32.mrf.mxu0
    %2123 = vmatprep.mubr.bf16.mxu0 %v1803
    %2124 = vmatmul.mubr.bf16.gmra.mxu0 %v1802
    %v2125 = vpop.f32.mrf.mxu0
    %v2126 = vadd.f32 %v1873, %v2125
    %v2127 = vpop.f32.mrf.mxu0
    %v2128 = vpop.f32.mrf.mxu0
    %v2129 = vadd.f32 %v1873, %v2128
    %v2130 = vpop.f32.mrf.mxu0
    %2131 = vmatprep.mubr.bf16.mxu0 %v1805
    %2132 = vmatmul.mubr.bf16.gmra.mxu0 %v1804
    %v2133 = vpop.f32.mrf.mxu0
    %v2134 = vadd.f32 %v1873, %v2133
    %v2135 = vpop.f32.mrf.mxu0
    %v2136 = vpop.f32.mrf.mxu0
    %v2137 = vadd.f32 %v1873, %v2136
    %v2138 = vpop.f32.mrf.mxu0
    %2139 = vmatprep.mubr.bf16.mxu0 %v1807
    %2140 = vmatmul.mubr.bf16.gmra.mxu0 %v1806
    %v2141 = vpop.f32.mrf.mxu0
    %v2142 = vadd.f32 %v1873, %v2141
    %v2143 = vpop.f32.mrf.mxu0
    %v2144 = vpop.f32.mrf.mxu0
    %v2145 = vadd.f32 %v1873, %v2144
    %v2146 = vpop.f32.mrf.mxu0
    %2147 = vmatprep.mubr.bf16.mxu0 %v1809
    %2148 = vmatmul.mubr.bf16.gmra.mxu0 %v1808
    %v2149 = vpop.f32.mrf.mxu0
    %v2150 = vadd.f32 %v1873, %v2149
    %v2151 = vpop.f32.mrf.mxu0
    %v2152 = vpop.f32.mrf.mxu0
    %v2153 = vadd.f32 %v1873, %v2152
    %v2154 = vpop.f32.mrf.mxu0
    %2155 = vmatprep.mubr.bf16.mxu0 %v1811
    %2156 = vmatmul.mubr.bf16.gmra.mxu0 %v1810
    %v2157 = vpop.f32.mrf.mxu0
    %v2158 = vadd.f32 %v1873, %v2157
    %v2159 = vpop.f32.mrf.mxu0
    %v2160 = vpop.f32.mrf.mxu0
    %v2161 = vadd.f32 %v1873, %v2160
    %v2162 = vpop.f32.mrf.mxu0
    %2163 = vmatprep.mubr.bf16.mxu0 %v1813
    %2164 = vmatmul.mubr.bf16.gmra.mxu0 %v1812
    %v2165 = vpop.f32.mrf.mxu0
    %v2166 = vadd.f32 %v1873, %v2165
    %v2167 = vpop.f32.mrf.mxu0
    %v2168 = vpop.f32.mrf.mxu0
    %v2169 = vadd.f32 %v1873, %v2168
    %v2170 = vpop.f32.mrf.mxu0
    %2171 = vmatprep.mubr.bf16.mxu0 %v1815
    %2172 = vmatmul.mubr.bf16.gmra.mxu0 %v1814
    %v2173 = vpop.f32.mrf.mxu0
    %v2174 = vadd.f32 %v1873, %v2173
    %v2175 = vpop.f32.mrf.mxu0
    %v2176 = vpop.f32.mrf.mxu0
    %v2177 = vadd.f32 %v1873, %v2176
    %v2178 = vpop.f32.mrf.mxu0
    %2179 = vmatprep.mubr.bf16.mxu0 %v1817
    %2180 = vmatmul.mubr.bf16.gmra.mxu0 %v1816
    %v2181 = vpop.f32.mrf.mxu0
    %v2182 = vadd.f32 %v1873, %v2181
    %v2183 = vpop.f32.mrf.mxu0
    %v2184 = vpop.f32.mrf.mxu0
    %v2185 = vadd.f32 %v1873, %v2184
    %v2186 = vpop.f32.mrf.mxu0
    %2187 = vmatprep.mubr.bf16.mxu0 %v1819
    %2188 = vmatmul.mubr.bf16.gmra.mxu0 %v1818
    %v2189 = vpop.f32.mrf.mxu0
    %v2190 = vadd.f32 %v1873, %v2189
    %v2191 = vpop.f32.mrf.mxu0
    %v2192 = vpop.f32.mrf.mxu0
    %v2193 = vadd.f32 %v1873, %v2192
    %v2194 = vpop.f32.mrf.mxu0
    %2195 = vmatprep.mubr.bf16.mxu0 %v1821
    %2196 = vmatmul.mubr.bf16.gmra.mxu0 %v1820
    %v2197 = vpop.f32.mrf.mxu0
    %v2198 = vadd.f32 %v1873, %v2197
    %v2199 = vpop.f32.mrf.mxu0
    %v2200 = vpop.f32.mrf.mxu0
    %v2201 = vadd.f32 %v1873, %v2200
    %v2202 = vpop.f32.mrf.mxu0
    %2203 = vmatprep.mubr.bf16.mxu0 %v1823
    %2204 = vmatmul.mubr.bf16.gmra.mxu0 %v1822
    %v2205 = vpop.f32.mrf.mxu0
    %v2206 = vadd.f32 %v1873, %v2205
    %v2207 = vpop.f32.mrf.mxu0
    %v2208 = vpop.f32.mrf.mxu0
    %v2209 = vadd.f32 %v1873, %v2208
    %v2210 = vpop.f32.mrf.mxu0
    %2211 = vmatprep.mubr.bf16.mxu0 %v1825
    %2212 = vmatmul.mubr.bf16.gmra.mxu0 %v1824
    %v2213 = vpop.f32.mrf.mxu0
    %v2214 = vadd.f32 %v1873, %v2213
    %v2215 = vpop.f32.mrf.mxu0
    %v2216 = vpop.f32.mrf.mxu0
    %v2217 = vadd.f32 %v1873, %v2216
    %v2218 = vpop.f32.mrf.mxu0
    %2219 = vmatprep.mubr.bf16.mxu0 %v1827
    %2220 = vmatmul.mubr.bf16.gmra.mxu0 %v1826
    %v2221 = vpop.f32.mrf.mxu0
    %v2222 = vadd.f32 %v1873, %v2221
    %v2223 = vpop.f32.mrf.mxu0
    %v2224 = vpop.f32.mrf.mxu0
    %v2225 = vadd.f32 %v1873, %v2224
    %v2226 = vpop.f32.mrf.mxu0
    %2227 = vmatprep.mubr.bf16.mxu0 %v1829
    %2228 = vmatmul.mubr.bf16.gmra.mxu0 %v1828
    %v2229 = vpop.f32.mrf.mxu0
    %v2230 = vadd.f32 %v1873, %v2229
    %v2231 = vpop.f32.mrf.mxu0
    %v2232 = vpop.f32.mrf.mxu0
    %v2233 = vadd.f32 %v1873, %v2232
    %v2234 = vpop.f32.mrf.mxu0
    %2235 = vmatprep.mubr.bf16.mxu0 %v1831
    %2236 = vmatmul.mubr.bf16.gmra.mxu0 %v1830
    %v2237 = vpop.f32.mrf.mxu0
    %v2238 = vadd.f32 %v1873, %v2237
    %v2239 = vpop.f32.mrf.mxu0
    %v2240 = vpop.f32.mrf.mxu0
    %v2241 = vadd.f32 %v1873, %v2240
    %v2242 = vpop.f32.mrf.mxu0
    %2243 = vmatprep.mubr.bf16.mxu0 %v1833
    %2244 = vmatmul.mubr.bf16.gmra.mxu0 %v1832
    %v2245 = vpop.f32.mrf.mxu0
    %v2246 = vadd.f32 %v1873, %v2245
    %v2247 = vpop.f32.mrf.mxu0
    %v2248 = vpop.f32.mrf.mxu0
    %v2249 = vadd.f32 %v1873, %v2248
    %v2250 = vpop.f32.mrf.mxu0
    %2251 = vmatprep.mubr.bf16.mxu0 %v1835
    %2252 = vmatmul.mubr.bf16.gmra.mxu0 %v1834
    %v2253 = vpop.f32.mrf.mxu0
    %v2254 = vadd.f32 %v1873, %v2253
    %v2255 = vpop.f32.mrf.mxu0
    %v2256 = vpop.f32.mrf.mxu0
    %v2257 = vadd.f32 %v1873, %v2256
    %v2258 = vpop.f32.mrf.mxu0
    %2259 = vdwg.mxu0
    %2260 = vst [vmem:[#allocation8] sm:$0xff] %v2006
    %2261 = vst [vmem:[#allocation8 + $0x8] sm:$0xff] %v2009
    %2262 = vst [vmem:[#allocation8 + $0x10] sm:$0xff] %v2014
    %2263 = vst [vmem:[#allocation8 + $0x18] sm:$0xff] %v2017
    %2264 = vst [vmem:[#allocation8 + $0x20] sm:$0xff] %v2022
    %2265 = vst [vmem:[#allocation8 + $0x28] sm:$0xff] %v2025
    %2266 = vst [vmem:[#allocation8 + $0x30] sm:$0xff] %v2030
    %2267 = vst [vmem:[#allocation8 + $0x38] sm:$0xff] %v2033
    %2268 = vst [vmem:[#allocation8 + $0x40] sm:$0xff] %v2038
    %2269 = vst [vmem:[#allocation8 + $0x48] sm:$0xff] %v2041
    %2270 = vst [vmem:[#allocation8 + $0x50] sm:$0xff] %v2046
    %2271 = vst [vmem:[#allocation8 + $0x58] sm:$0xff] %v2049
    %2272 = vst [vmem:[#allocation8 + $0x60] sm:$0xff] %v2054
    %2273 = vst [vmem:[#allocation8 + $0x68] sm:$0xff] %v2057
    %2274 = vst [vmem:[#allocation8 + $0x70] sm:$0xff] %v2062
    %2275 = vst [vmem:[#allocation8 + $0x78] sm:$0xff] %v2065
    %2276 = vst [vmem:[#allocation8 + $0x80] sm:$0xff] %v2070
    %2277 = vst [vmem:[#allocation8 + $0x88] sm:$0xff] %v2073
    %2278 = vst [vmem:[#allocation8 + $0x90] sm:$0xff] %v2078
    %2279 = vst [vmem:[#allocation8 + $0x98] sm:$0xff] %v2081
    %2280 = vst [vmem:[#allocation8 + $0xa0] sm:$0xff] %v2086
    %2281 = vst [vmem:[#allocation8 + $0xa8] sm:$0xff] %v2089
    %2282 = vst [vmem:[#allocation8 + $0xb0] sm:$0xff] %v2094
    %2283 = vst [vmem:[#allocation8 + $0xb8] sm:$0xff] %v2097
    %2284 = vst [vmem:[#allocation8 + $0xc0] sm:$0xff] %v2102
    %2285 = vst [vmem:[#allocation8 + $0xc8] sm:$0xff] %v2105
    %2286 = vst [vmem:[#allocation8 + $0xd0] sm:$0xff] %v2110
    %2287 = vst [vmem:[#allocation8 + $0xd8] sm:$0xff] %v2113
    %2288 = vst [vmem:[#allocation8 + $0xe0] sm:$0xff] %v2118
    %2289 = vst [vmem:[#allocation8 + $0xe8] sm:$0xff] %v2121
    %2290 = vst [vmem:[#allocation8 + $0xf0] sm:$0xff] %v2126
    %2291 = vst [vmem:[#allocation8 + $0xf8] sm:$0xff] %v2129
    %2292 = vst [vmem:[#allocation8 + $0x100] sm:$0xff] %v2134
    %2293 = vst [vmem:[#allocation8 + $0x108] sm:$0xff] %v2137
    %2294 = vst [vmem:[#allocation8 + $0x110] sm:$0xff] %v2142
    %2295 = vst [vmem:[#allocation8 + $0x118] sm:$0xff] %v2145
    %2296 = vst [vmem:[#allocation8 + $0x120] sm:$0xff] %v2150
    %2297 = vst [vmem:[#allocation8 + $0x128] sm:$0xff] %v2153
    %2298 = vst [vmem:[#allocation8 + $0x130] sm:$0xff] %v2158
    %2299 = vst [vmem:[#allocation8 + $0x138] sm:$0xff] %v2161
    %2300 = vst [vmem:[#allocation8 + $0x140] sm:$0xff] %v2166
    %2301 = vst [vmem:[#allocation8 + $0x148] sm:$0xff] %v2169
    %2302 = vst [vmem:[#allocation8 + $0x150] sm:$0xff] %v2174
    %2303 = vst [vmem:[#allocation8 + $0x158] sm:$0xff] %v2177
    %2304 = vst [vmem:[#allocation8 + $0x160] sm:$0xff] %v2182
    %2305 = vst [vmem:[#allocation8 + $0x168] sm:$0xff] %v2185
    %2306 = vst [vmem:[#allocation8 + $0x170] sm:$0xff] %v2190
    %2307 = vst [vmem:[#allocation8 + $0x178] sm:$0xff] %v2193
    %2308 = vst [vmem:[#allocation8 + $0x180] sm:$0xff] %v2198
    %2309 = vst [vmem:[#allocation8 + $0x188] sm:$0xff] %v2201
    %2310 = vst [vmem:[#allocation8 + $0x190] sm:$0xff] %v2206
    %2311 = vst [vmem:[#allocation8 + $0x198] sm:$0xff] %v2209
    %2312 = vst [vmem:[#allocation8 + $0x1a0] sm:$0xff] %v2214
    %2313 = vst [vmem:[#allocation8 + $0x1a8] sm:$0xff] %v2217
    %2314 = vst [vmem:[#allocation8 + $0x1b0] sm:$0xff] %v2222
    %2315 = vst [vmem:[#allocation8 + $0x1b8] sm:$0xff] %v2225
    %2316 = vst [vmem:[#allocation8 + $0x1c0] sm:$0xff] %v2230
    %2317 = vst [vmem:[#allocation8 + $0x1c8] sm:$0xff] %v2233
    %2318 = vst [vmem:[#allocation8 + $0x1d0] sm:$0xff] %v2238
    %2319 = vst [vmem:[#allocation8 + $0x1d8] sm:$0xff] %v2241
    %2320 = vst [vmem:[#allocation8 + $0x1e0] sm:$0xff] %v2246
    %2321 = vst [vmem:[#allocation8 + $0x1e8] sm:$0xff] %v2249
    %2322 = vst [vmem:[#allocation8 + $0x1f0] sm:$0xff] %v2254
    %2323 = vst [vmem:[#allocation8 + $0x1f8] sm:$0xff] %v2257
    // Predicated region
    $region34: #{tpu_custom_call.1} parent=1 // pred_check
      _
    $region35: #{tpu_custom_call.1} parent=1 // pred_check_branch
      %2325 = sbr.rel (0) target = $region37
    $region36: #{tpu_custom_call.1} parent=1 // pred_region
      %s2327 = ssub.s32 8192, 8192
      %2328 = vsyncadd [#allocation4], %s2327
      %s2329 = sshll.u32 [#allocation8], 4
      %s2330 = int_to_ptr.vmem [resolvable:$true] %s2329
      %2335 = dma.vmem_to_hbm [thread:$0]  %s2330, 8192, %s5, [#allocation4], 128, 128, 8
    $region37: #{tpu_custom_call.1} parent=1 // pred_fallthru
      _
    // Predicated region
    $region38: #{tpu_custom_call.1} parent=1 // pred_check
      _
    $region39: #{tpu_custom_call.1} parent=1 // pred_check_branch
      %2337 = sbr.rel (0) target = $region41
    $region40: #{tpu_custom_call.1} parent=1 // pred_region
      %2338 = dma.done [#allocation4], 8192
    $region41: #{tpu_custom_call.1} parent=1 // pred_fallthru
      _
    %2339 = vsyncpa [#allocation3], 1
    %2340 = vsyncpa [#allocation6], 1
    %2341 = vsyncpa [#allocation4], 1

</llo_original>
